<compile_context>
chip_gen: v7x
topology: tpu7x:2x2x1
jax: 0.10.0
libtpu: 0.0.40
codegen_flags: <defaults>
</compile_context>

<pallas_src>
import functools
import math

import jax
import jax.numpy as jnp
from jax.experimental import pallas as pl
from jax.experimental.pallas import tpu as pltpu


def _round_up(x, m):
    return ((x + m - 1) // m) * m


def _vmem_limit_bytes():
    """Generation-dependent VMEM budget (leave headroom on v7x's 64 MiB)."""
    try:
        cap = pltpu.get_tpu_info().vmem_capacity_bytes
    except Exception:
        return 48 * 1024 * 1024                       # conservative, safe everywhere
    if cap <= 64 * 1024 * 1024:
        return 52 * 1024 * 1024                       # v7x: headroom for Mosaic scratch
    return 100 * 1024 * 1024                          # v5e / v6e (128 MiB physical)


def _w_spec(shape, single_buffer):
    """BlockSpec for a grid-invariant (constant index_map) weight block."""
    if single_buffer:
        # Data never changes across the grid -> single-buffer to halve its
        # resident VMEM footprint.
        return pl.BlockSpec(shape, lambda i: (0, 0), pipeline_mode=pl.Buffered(1))
    return pl.BlockSpec(shape, lambda i: (0, 0))


# ----------------------------- Pallas kernels ------------------------------

def _mlp_router_kernel(x_ref, wf_ref, wd_ref, mlp_ref, rtr_ref, *, ip):
    """One wide MXU matmul for gate|up|router, then SwiGLU + down_proj."""
    x = x_ref[...]                                                     # (tm, Hp) bf16
    gur = jnp.dot(x, wf_ref[...], preferred_element_type=jnp.float32)  # (tm, 2Ip+NKp) f32
    g = gur[:, :ip]                                                    # 128-aligned slices
    u = gur[:, ip:2 * ip]
    r = gur[:, 2 * ip:]
    h = (jax.nn.silu(g) * u).astype(x.dtype)                           # bf16 for MXU
    mlp_ref[...] = jnp.dot(h, wd_ref[...],
                           preferred_element_type=jnp.float32
                           ).astype(mlp_ref.dtype)                     # (tm, Hp) bf16
    rtr_ref[...] = r.astype(rtr_ref.dtype)                             # (tm, NKp) bf16


def _expert_mix_kernel(x_ref, de_ref, ue_ref, idx_ref, rw_ref, mlp_ref,
                       out_ref, *, top_k):
    """Dense expert mixing (toy num_experts) + residual add.

    s   = x @ down_embed^T   (NT contraction; no XLA-side transpose)
    ew  = silu(s) * dense_mask(indices, routing_weights)      [f32]
    es  = ew @ up_embed
    out = mlp + es
    """
    x = x_ref[...]                                                     # (tm, Hp) bf16
    s = jax.lax.dot_general(x, de_ref[...], (((1,), (1,)), ((), ())),
                            preferred_element_type=jnp.float32)        # (tm, Ep) f32
    sil = jax.nn.silu(s)

    idx = idx_ref[...]                                                 # (tm, Kp) int32
    rw = rw_ref[...]                                                   # (tm, Kp) f32
    e_iota = jax.lax.broadcasted_iota(jnp.int32, sil.shape, 1)         # (tm, Ep)
    w = jnp.zeros_like(sil)
    for k in range(top_k):                                             # small static unroll
        w = w + jnp.where(e_iota == idx[:, k:k + 1], rw[:, k:k + 1], 0.0)

    # Keep routing weights in f32 for the mixing contraction (accuracy).
    ew = sil * w                                                       # (tm, Ep) f32
    es = jnp.dot(ew, ue_ref[...].astype(jnp.float32),
                 preferred_element_type=jnp.float32)                   # (tm, Hp) f32
    out_ref[...] = (mlp_ref[...].astype(jnp.float32) + es).astype(out_ref.dtype)


# ------------------------ one-time parameter prep ---------------------------

def prepare_params(params, *, dtype=jnp.bfloat16):
    """Pad to (8,128)-aligned sizes, cast to bf16, fuse gate|up|router.

    Called once when the layer is built, NOT per forward call.
    """
    H, I = params["wg_t"].shape
    nk2 = params["wr_t"].shape[1]                       # == 2 * num_keys
    E = params["down_embed"].shape[0]
    Hp, Ip = _round_up(H, 128), _round_up(I, 128)
    NKp, Ep = _round_up(nk2, 128), _round_up(E, 128)

    def pad2(a, r, c):
        return jnp.pad(a, ((0, r - a.shape[0]), (0, c - a.shape[1])))

    w_fused = jnp.concatenate([pad2(params["wg_t"], Hp, Ip),
                               pad2(params["wu_t"], Hp, Ip),
                               pad2(params["wr_t"], Hp, NKp)], axis=1).astype(dtype)
    prepped = {
        "w_fused": w_fused,                                       # (Hp, 2Ip+NKp)
        "wd": pad2(params["wd_t"], Ip, Hp).astype(dtype),         # (Ip, Hp)
        "down_embed": pad2(params["down_embed"], Ep, Hp).astype(dtype),  # (Ep, Hp)
        "up_embed": pad2(params["up_embed"], Ep, Hp).astype(dtype),      # (Ep, Hp)
    }
    dims = dict(H=H, I=I, nk2=nk2, E=E, Hp=Hp, Ip=Ip, NKp=NKp, Ep=Ep)
    return prepped, dims


# ------------------------------ Forward -------------------------------------

def doge_cdmoe_forward(hidden_states, prepped, *, dims, num_keys, top_k,
                       norm_topk_prob=False, tm=256, single_buffer_weights=True):
    B, S, H = hidden_states.shape
    T = B * S
    out_dtype = hidden_states.dtype
    cd = jnp.bfloat16                       # MXU compute / intermediate storage dtype

    Hp, Ip, NKp, Ep = dims["Hp"], dims["Ip"], dims["NKp"], dims["Ep"]
    nk2 = dims["nk2"]
    Wtot = 2 * Ip + NKp

    # Token tiling: multiple of 16 (bf16 sublane pack); prefer >=2 grid steps so
    # the single "parallel" axis can split across v7x's two TensorCores.
    tm = min(tm, max(16, _round_up(pl.cdiv(T, 2), 16)))
    Tp = _round_up(T, tm)                   # no tokens dropped
    n_tiles = Tp // tm

    x_p = jnp.pad(hidden_states.reshape(T, H),
                  ((0, Tp - T), (0, Hp - H))).astype(cd)

    cparams = pltpu.CompilerParams(dimension_semantics=("parallel",),
                                   vmem_limit_bytes=_vmem_limit_bytes())

    # ---- kernel 1: fused (gate|up|router) matmul + SwiGLU + down_proj -------
    # TODO(synk): at real H/I add a K/N-reduction grid axis ("arbitrary", last)
    # with an f32 VMEM accumulator instead of fully-resident weights.
    mlp_p, router_p = pl.pallas_call(
        functools.partial(_mlp_router_kernel, ip=Ip),
        out_shape=(jax.ShapeDtypeStruct((Tp, Hp), cd),            # bf16 intermediate
                   jax.ShapeDtypeStruct((Tp, NKp), cd)),          # bf16 router writeback
        grid=(n_tiles,),
        in_specs=[pl.BlockSpec((tm, Hp), lambda i: (i, 0)),
                  _w_spec((Hp, Wtot), single_buffer_weights),
                  _w_spec((Ip, Hp), single_buffer_weights)],
        out_specs=(pl.BlockSpec((tm, Hp), lambda i: (i, 0)),
                   pl.BlockSpec((tm, NKp), lambda i: (i, 0))),
        compiler_params=cparams,
    )(x_p, prepped["w_fused"], prepped["wd"])

    # ---- routing glue (plain JAX) -------------------------------------------
    # TODO(synk): the data-dependent two-stage product-key top-k + softmax has
    # no clean Pallas TPU equivalent; it stays in XLA between the two kernels.
    router = router_p[:T, :nk2].astype(jnp.float32)
    router_logits = router.reshape(2, T, num_keys)    # same reinterpret as torch .view
    scores_xy, indices_xy = jax.lax.top_k(router_logits, num_keys)
    all_scores = scores_xy[0][:, :, None] + scores_xy[1][:, None, :]
    all_indices = indices_xy[0][:, :, None] * num_keys + indices_xy[1][:, None, :]
    all_scores = all_scores.reshape(T, num_keys * num_keys)
    all_indices = all_indices.reshape(T, num_keys * num_keys)
    scores, pos = jax.lax.top_k(all_scores, top_k)
    indices = jnp.take_along_axis(all_indices, pos, axis=-1)          # (T, K) int32
    routing_weights = jax.nn.softmax(scores, axis=-1)
    if norm_topk_prob:
        routing_weights = routing_weights / routing_weights.sum(-1, keepdims=True)

    Kp = _round_up(top_k, 128)                         # lane-dense idx / rw blocks
    idx_p = jnp.pad(indices, ((0, Tp - T), (0, Kp - top_k)))
    rw_p = jnp.pad(routing_weights, ((0, Tp - T), (0, Kp - top_k)))

    # ---- kernel 2: MXU expert mixing + residual add --------------------------
    # TODO(synk): for large num_experts switch to a PrefetchScalarGridSpec
    # top-k row gather instead of dense all-expert scoring.
    io_alias = {5: 0} if jnp.dtype(out_dtype) == jnp.dtype(cd) else {}
    out_p = pl.pallas_call(
        functools.partial(_expert_mix_kernel, top_k=top_k),
        out_shape=jax.ShapeDtypeStruct((Tp, Hp), out_dtype),
        grid=(n_tiles,),
        in_specs=[pl.BlockSpec((tm, Hp), lambda i: (i, 0)),
                  _w_spec((Ep, Hp), single_buffer_weights),
                  _w_spec((Ep, Hp), single_buffer_weights),
                  pl.BlockSpec((tm, Kp), lambda i: (i, 0)),
                  pl.BlockSpec((tm, Kp), lambda i: (i, 0)),
                  pl.BlockSpec((tm, Hp), lambda i: (i, 0))],
        out_specs=pl.BlockSpec((tm, Hp), lambda i: (i, 0)),
        compiler_params=cparams,
        input_output_aliases=io_alias,
    )(x_p, prepped["down_embed"], prepped["up_embed"], idx_p, rw_p, mlp_p)

    return out_p[:T, :H].reshape(B, S, H), router_logits


# --------------------------- pure-JAX reference -----------------------------
# Mirrors the kernels' mixed precision (bf16 operands, f32 accumulation,
# bf16-quantized router writeback) so routing decisions and values compare
# tightly.

def ref_forward(hidden_states, params, *, num_keys, top_k, norm_topk_prob=False):
    B, S, H = hidden_states.shape
    T = B * S
    cd = jnp.bfloat16
    xb = hidden_states.reshape(T, H).astype(cd)

    router = jnp.dot(xb, params["wr_t"].astype(cd),
                     preferred_element_type=jnp.float32)
    router = router.astype(cd).astype(jnp.float32)     # emulate bf16 writeback
    router_logits = router.reshape(2, T, num_keys)
    scores_xy, indices_xy = jax.lax.top_k(router_logits, num_keys)
    all_scores = scores_xy[0][:, :, None] + scores_xy[1][:, None, :]
    all_indices = indices_xy[0][:, :, None] * num_keys + indices_xy[1][:, None, :]
    all_scores = all_scores.reshape(T, num_keys * num_keys)
    all_indices = all_indices.reshape(T, num_keys * num_keys)
    scores, pos = jax.lax.top_k(all_scores, top_k)
    indices = jnp.take_along_axis(all_indices, pos, axis=-1)
    rw = jax.nn.softmax(scores, axis=-1)
    if norm_topk_prob:
        rw = rw / rw.sum(-1, keepdims=True)

    de = jnp.take(params["down_embed"].astype(cd), indices, axis=0)
    ue = jnp.take(params["up_embed"].astype(cd), indices, axis=0)
    ew = jax.nn.silu(jnp.einsum("tkh,th->tk", de.astype(jnp.float32),
                                xb.astype(jnp.float32))) * rw
    es = jnp.einsum("tk,tkh->th", ew, ue.astype(jnp.float32))

    g = jnp.dot(xb, params["wg_t"].astype(cd), preferred_element_type=jnp.float32)
    u = jnp.dot(xb, params["wu_t"].astype(cd), preferred_element_type=jnp.float32)
    h = (jax.nn.silu(g) * u).astype(cd)
    mlp = jnp.dot(h, params["wd_t"].astype(cd), preferred_element_type=jnp.float32)
    return (mlp + es).reshape(B, S, H), router_logits


# --------------------------------- main -------------------------------------

if __name__ == "__main__":
    # Small DogeConfig-consistent sizes
    hidden_size = 32
    intermediate_size = 64
    num_experts = 64
    num_keys = math.floor(math.sqrt(num_experts))   # 8
    top_k = 4                                       # num_experts_per_tok
    norm_topk_prob = False
    bsz, seq_len = 2, 8

    key = jax.random.PRNGKey(0)
    k_x, k_g, k_u, k_d, k_r, k_de, k_ue = jax.random.split(key, 7)
    std = 0.02

    x = jax.random.normal(k_x, (bsz, seq_len, hidden_size), jnp.float32)
    params = {
        # nn.Linear weight is [out, in]; store transposed [in, out]
        "wg_t": std * jax.random.normal(k_g, (hidden_size, intermediate_size), jnp.float32),
        "wu_t": std * jax.random.normal(k_u, (hidden_size, intermediate_size), jnp.float32),
        "wd_t": std * jax.random.normal(k_d, (intermediate_size, hidden_size), jnp.float32),
        "wr_t": std * jax.random.normal(k_r, (hidden_size, num_keys * 2), jnp.float32),
        "down_embed": std * jax.random.normal(k_de, (num_experts, hidden_size), jnp.float32),
        "up_embed": std * jax.random.normal(k_ue, (num_experts, hidden_size), jnp.float32),
    }

    # One-time kernel-ready weight prep (pad + bf16 cast + gate|up|router fuse).
    prepped, dims = prepare_params(params)
    prepped = jax.tree_util.tree_map(jax.block_until_ready, prepped)

    def build(single_buffer):
        return jax.jit(functools.partial(
            doge_cdmoe_forward, dims=dims, num_keys=num_keys, top_k=top_k,
            norm_topk_prob=norm_topk_prob, single_buffer_weights=single_buffer))

    try:
        fwd = build(True)                            # single-buffered constant weights
        out, router_logits = fwd(x, prepped)
        out = jax.block_until_ready(out)
    except Exception:
        # Fallback if this jax build rejects pl.Buffered(1) single-buffering.
        fwd = build(False)
        out, router_logits = fwd(x, prepped)
        out = jax.block_until_ready(out)
    router_logits = jax.block_until_ready(router_logits)

    ref_out, ref_router = ref_forward(
        x, params, num_keys=num_keys, top_k=top_k, norm_topk_prob=norm_topk_prob)

    assert out.shape == (bsz, seq_len, hidden_size)
    assert router_logits.shape == (2, bsz * seq_len, num_keys)
    assert jnp.allclose(router_logits, ref_router, atol=1e-2, rtol=1e-2)
    assert jnp.allclose(out, ref_out.astype(out.dtype), atol=1e-2, rtol=1e-2)

    print("KERNEL_OK")
</pallas_src>

<mosaic_0001>
module attributes {stable_mosaic.version = 11 : i64} {
  func.func @_mlp_router_kernel(%arg0: i32, %arg1: memref<16x128xbf16, #tpu.memory_space<vmem>>, %arg2: memref<128x384xbf16, #tpu.memory_space<vmem>>, %arg3: memref<128x128xbf16, #tpu.memory_space<vmem>>, %arg4: memref<16x128xbf16, #tpu.memory_space<vmem>>, %arg5: memref<16x128xbf16, #tpu.memory_space<vmem>>) attributes {dimension_semantics = [#tpu.dimension_semantics<parallel>], iteration_bounds = array<i64: 1>, scalar_prefetch = 0 : i64, scratch_operands = 0 : i64, tpu.core_type = #tpu.core_type<tc>, window_params = [{transform_indices = @transform_0, window_bounds = array<i64: 16, 128>}, {pipeline_mode = #tpu.pipeline_mode<synchronous>, transform_indices = @transform_1, window_bounds = array<i64: 128, 384>}, {pipeline_mode = #tpu.pipeline_mode<synchronous>, transform_indices = @transform_2, window_bounds = array<i64: 128, 128>}, {transform_indices = @transform_3, window_bounds = array<i64: 16, 128>}, {transform_indices = @transform_4, window_bounds = array<i64: 16, 128>}]} {
    %c0 = arith.constant 0 : index
    %c0_0 = arith.constant 0 : index
    %0 = vector.load %arg1[%c0, %c0_0] : memref<16x128xbf16, #tpu.memory_space<vmem>>, vector<16x128xbf16>
    %c0_1 = arith.constant 0 : index
    %c0_2 = arith.constant 0 : index
    %1 = vector.load %arg2[%c0_1, %c0_2] : memref<128x384xbf16, #tpu.memory_space<vmem>>, vector<128x384xbf16>
    %cst = arith.constant dense<0.000000e+00> : vector<16x384xf32>
    %2 = tpu.matmul %0, %1, %cst {dimension_numbers = #tpu.dot_dimension_numbers<[1], [0], [0], [1], [0, 0, 1, 1], [], []>} : vector<16x128xbf16>, vector<128x384xbf16>, vector<16x384xf32> -> vector<16x384xf32>
    %3 = vector.extract_strided_slice %2 {offsets = [0, 0], sizes = [16, 128], strides = [1, 1]} : vector<16x384xf32> to vector<16x128xf32>
    %4 = vector.extract_strided_slice %2 {offsets = [0, 128], sizes = [16, 128], strides = [1, 1]} : vector<16x384xf32> to vector<16x128xf32>
    %5 = vector.extract_strided_slice %2 {offsets = [0, 256], sizes = [16, 128], strides = [1, 1]} : vector<16x384xf32> to vector<16x128xf32>
    %6 = arith.negf %3 : vector<16x128xf32>
    %7 = math.exp %6 : vector<16x128xf32>
    %cst_3 = arith.constant 1.000000e+00 : f32
    %8 = vector.broadcast %cst_3 : f32 to vector<16x128xf32>
    %9 = arith.addf %8, %7 : vector<16x128xf32>
    %10 = arith.divf %8, %9 : vector<16x128xf32>
    %11 = arith.mulf %3, %10 : vector<16x128xf32>
    %12 = arith.mulf %11, %4 : vector<16x128xf32>
    %13 = arith.truncf %12 : vector<16x128xf32> to vector<16x128xbf16>
    %c0_4 = arith.constant 0 : index
    %c0_5 = arith.constant 0 : index
    %14 = vector.load %arg3[%c0_4, %c0_5] : memref<128x128xbf16, #tpu.memory_space<vmem>>, vector<128x128xbf16>
    %cst_6 = arith.constant dense<0.000000e+00> : vector<16x128xf32>
    %15 = tpu.matmul %13, %14, %cst_6 {dimension_numbers = #tpu.dot_dimension_numbers<[1], [0], [0], [1], [0, 0, 1, 1], [], []>} : vector<16x128xbf16>, vector<128x128xbf16>, vector<16x128xf32> -> vector<16x128xf32>
    %16 = arith.truncf %15 : vector<16x128xf32> to vector<16x128xbf16>
    %c0_7 = arith.constant 0 : index
    %c0_8 = arith.constant 0 : index
    %17 = vector.load %arg4[%c0_7, %c0_8] : memref<16x128xbf16, #tpu.memory_space<vmem>>, vector<16x128xbf16>
    tpu.vector_store %arg4[%c0_7, %c0_8], %16 {strides = array<i32>} : memref<16x128xbf16, #tpu.memory_space<vmem>>, vector<16x128xbf16>,
    %18 = arith.truncf %5 : vector<16x128xf32> to vector<16x128xbf16>
    %c0_9 = arith.constant 0 : index
    %c0_10 = arith.constant 0 : index
    %19 = vector.load %arg5[%c0_9, %c0_10] : memref<16x128xbf16, #tpu.memory_space<vmem>>, vector<16x128xbf16>
    tpu.vector_store %arg5[%c0_9, %c0_10], %18 {strides = array<i32>} : memref<16x128xbf16, #tpu.memory_space<vmem>>, vector<16x128xbf16>,
    return
  }
  func.func @transform_0(%arg0: i32) -> (i32, i32) {
    %c0_i32 = arith.constant 0 : i32
    %c0_i32_0 = arith.constant 0 : i32
    return %arg0, %c0_i32 : i32, i32
  }
  func.func @transform_1(%arg0: i32) -> (i32, i32) {
    %c0_i32 = arith.constant 0 : i32
    %c0_i32_0 = arith.constant 0 : i32
    %c0_i32_1 = arith.constant 0 : i32
    return %c0_i32, %c0_i32_0 : i32, i32
  }
  func.func @transform_2(%arg0: i32) -> (i32, i32) {
    %c0_i32 = arith.constant 0 : i32
    %c0_i32_0 = arith.constant 0 : i32
    %c0_i32_1 = arith.constant 0 : i32
    return %c0_i32, %c0_i32_0 : i32, i32
  }
  func.func @transform_3(%arg0: i32) -> (i32, i32) {
    %c0_i32 = arith.constant 0 : i32
    %c0_i32_0 = arith.constant 0 : i32
    return %arg0, %c0_i32 : i32, i32
  }
  func.func @transform_4(%arg0: i32) -> (i32, i32) {
    %c0_i32 = arith.constant 0 : i32
    %c0_i32_0 = arith.constant 0 : i32
    return %arg0, %c0_i32 : i32, i32
  }
}

module attributes {stable_mosaic.version = 11 : i64} {
  func.func @_expert_mix_kernel(%arg0: i32, %arg1: memref<16x128xbf16, #tpu.memory_space<vmem>>, %arg2: memref<128x128xbf16, #tpu.memory_space<vmem>>, %arg3: memref<128x128xbf16, #tpu.memory_space<vmem>>, %arg4: memref<16x128xi32, #tpu.memory_space<vmem>>, %arg5: memref<16x128xf32, #tpu.memory_space<vmem>>, %arg6: memref<16x128xbf16, #tpu.memory_space<vmem>>, %arg7: memref<16x128xf32, #tpu.memory_space<vmem>>) attributes {dimension_semantics = [#tpu.dimension_semantics<parallel>], iteration_bounds = array<i64: 1>, scalar_prefetch = 0 : i64, scratch_operands = 0 : i64, tpu.core_type = #tpu.core_type<tc>, window_params = [{transform_indices = @transform_0, window_bounds = array<i64: 16, 128>}, {pipeline_mode = #tpu.pipeline_mode<synchronous>, transform_indices = @transform_1, window_bounds = array<i64: 128, 128>}, {pipeline_mode = #tpu.pipeline_mode<synchronous>, transform_indices = @transform_2, window_bounds = array<i64: 128, 128>}, {transform_indices = @transform_3, window_bounds = array<i64: 16, 128>}, {transform_indices = @transform_4, window_bounds = array<i64: 16, 128>}, {transform_indices = @transform_5, window_bounds = array<i64: 16, 128>}, {transform_indices = @transform_6, window_bounds = array<i64: 16, 128>}]} {
    %c0 = arith.constant 0 : index
    %c0_0 = arith.constant 0 : index
    %0 = vector.load %arg1[%c0, %c0_0] : memref<16x128xbf16, #tpu.memory_space<vmem>>, vector<16x128xbf16>
    %c0_1 = arith.constant 0 : index
    %c0_2 = arith.constant 0 : index
    %1 = vector.load %arg2[%c0_1, %c0_2] : memref<128x128xbf16, #tpu.memory_space<vmem>>, vector<128x128xbf16>
    %cst = arith.constant dense<0.000000e+00> : vector<16x128xf32>
    %2 = tpu.matmul %0, %1, %cst {dimension_numbers = #tpu.dot_dimension_numbers<[1], [1], [0], [0], [0, 0, 1, 0], [], []>} : vector<16x128xbf16>, vector<128x128xbf16>, vector<16x128xf32> -> vector<16x128xf32>
    %3 = arith.negf %2 : vector<16x128xf32>
    %4 = math.exp %3 : vector<16x128xf32>
    %cst_3 = arith.constant 1.000000e+00 : f32
    %5 = vector.broadcast %cst_3 : f32 to vector<16x128xf32>
    %6 = arith.addf %5, %4 : vector<16x128xf32>
    %7 = arith.divf %5, %6 : vector<16x128xf32>
    %8 = arith.mulf %2, %7 : vector<16x128xf32>
    %c0_4 = arith.constant 0 : index
    %c0_5 = arith.constant 0 : index
    %9 = vector.load %arg4[%c0_4, %c0_5] : memref<16x128xi32, #tpu.memory_space<vmem>>, vector<16x128xi32>
    %c0_6 = arith.constant 0 : index
    %c0_7 = arith.constant 0 : index
    %10 = vector.load %arg5[%c0_6, %c0_7] : memref<16x128xf32, #tpu.memory_space<vmem>>, vector<16x128xf32>
    %11 = tpu.iota {dimensions = array<i32: 1>} : vector<16x128xi32>
    %cst_8 = arith.constant 0.000000e+00 : f32
    %12 = vector.broadcast %cst_8 : f32 to vector<16x128xf32>
    %13 = vector.extract_strided_slice %9 {offsets = [0, 0], sizes = [16, 1], strides = [1, 1]} : vector<16x128xi32> to vector<16x1xi32>
    %14 = vector.broadcast %13 : vector<16x1xi32> to vector<16x128xi32>
    %15 = arith.cmpi eq, %11, %14 : vector<16x128xi32>
    %16 = vector.extract_strided_slice %10 {offsets = [0, 0], sizes = [16, 1], strides = [1, 1]} : vector<16x128xf32> to vector<16x1xf32>
    %cst_9 = arith.constant 0.000000e+00 : f32
    %17 = vector.shape_cast %16 : vector<16x1xf32> to vector<16x1xf32>
    %18 = vector.broadcast %17 : vector<16x1xf32> to vector<16x128xf32>
    %19 = vector.broadcast %cst_9 : f32 to vector<16x128xf32>
    %20 = arith.select %15, %18, %19 : vector<16x128xi1>, vector<16x128xf32>
    %21 = arith.addf %12, %20 : vector<16x128xf32>
    %22 = vector.extract_strided_slice %9 {offsets = [0, 1], sizes = [16, 1], strides = [1, 1]} : vector<16x128xi32> to vector<16x1xi32>
    %23 = vector.broadcast %22 : vector<16x1xi32> to vector<16x128xi32>
    %24 = arith.cmpi eq, %11, %23 : vector<16x128xi32>
    %25 = vector.extract_strided_slice %10 {offsets = [0, 1], sizes = [16, 1], strides = [1, 1]} : vector<16x128xf32> to vector<16x1xf32>
    %cst_10 = arith.constant 0.000000e+00 : f32
    %26 = vector.shape_cast %25 : vector<16x1xf32> to vector<16x1xf32>
    %27 = vector.broadcast %26 : vector<16x1xf32> to vector<16x128xf32>
    %28 = vector.broadcast %cst_10 : f32 to vector<16x128xf32>
    %29 = arith.select %24, %27, %28 : vector<16x128xi1>, vector<16x128xf32>
    %30 = arith.addf %21, %29 : vector<16x128xf32>
    %31 = vector.extract_strided_slice %9 {offsets = [0, 2], sizes = [16, 1], strides = [1, 1]} : vector<16x128xi32> to vector<16x1xi32>
    %32 = vector.broadcast %31 : vector<16x1xi32> to vector<16x128xi32>
    %33 = arith.cmpi eq, %11, %32 : vector<16x128xi32>
    %34 = vector.extract_strided_slice %10 {offsets = [0, 2], sizes = [16, 1], strides = [1, 1]} : vector<16x128xf32> to vector<16x1xf32>
    %cst_11 = arith.constant 0.000000e+00 : f32
    %35 = vector.shape_cast %34 : vector<16x1xf32> to vector<16x1xf32>
    %36 = vector.broadcast %35 : vector<16x1xf32> to vector<16x128xf32>
    %37 = vector.broadcast %cst_11 : f32 to vector<16x128xf32>
    %38 = arith.select %33, %36, %37 : vector<16x128xi1>, vector<16x128xf32>
    %39 = arith.addf %30, %38 : vector<16x128xf32>
    %40 = vector.extract_strided_slice %9 {offsets = [0, 3], sizes = [16, 1], strides = [1, 1]} : vector<16x128xi32> to vector<16x1xi32>
    %41 = vector.broadcast %40 : vector<16x1xi32> to vector<16x128xi32>
    %42 = arith.cmpi eq, %11, %41 : vector<16x128xi32>
    %43 = vector.extract_strided_slice %10 {offsets = [0, 3], sizes = [16, 1], strides = [1, 1]} : vector<16x128xf32> to vector<16x1xf32>
    %cst_12 = arith.constant 0.000000e+00 : f32
    %44 = vector.shape_cast %43 : vector<16x1xf32> to vector<16x1xf32>
    %45 = vector.broadcast %44 : vector<16x1xf32> to vector<16x128xf32>
    %46 = vector.broadcast %cst_12 : f32 to vector<16x128xf32>
    %47 = arith.select %42, %45, %46 : vector<16x128xi1>, vector<16x128xf32>
    %48 = arith.addf %39, %47 : vector<16x128xf32>
    %49 = arith.mulf %8, %48 : vector<16x128xf32>
    %c0_13 = arith.constant 0 : index
    %c0_14 = arith.constant 0 : index
    %50 = vector.load %arg3[%c0_13, %c0_14] : memref<128x128xbf16, #tpu.memory_space<vmem>>, vector<128x128xbf16>
    %51 = arith.extf %50 : vector<128x128xbf16> to vector<128x128xf32>
    %cst_15 = arith.constant dense<0.000000e+00> : vector<16x128xf32>
    %52 = tpu.matmul %49, %51, %cst_15 {dimension_numbers = #tpu.dot_dimension_numbers<[1], [0], [0], [1], [0, 0, 1, 1], [], []>} : vector<16x128xf32>, vector<128x128xf32>, vector<16x128xf32> -> vector<16x128xf32>
    %c0_16 = arith.constant 0 : index
    %c0_17 = arith.constant 0 : index
    %53 = vector.load %arg6[%c0_16, %c0_17] : memref<16x128xbf16, #tpu.memory_space<vmem>>, vector<16x128xbf16>
    %54 = arith.extf %53 : vector<16x128xbf16> to vector<16x128xf32>
    %55 = arith.addf %54, %52 : vector<16x128xf32>
    %c0_18 = arith.constant 0 : index
    %c0_19 = arith.constant 0 : index
    %56 = vector.load %arg7[%c0_18, %c0_19] : memref<16x128xf32, #tpu.memory_space<vmem>>, vector<16x128xf32>
    tpu.vector_store %arg7[%c0_18, %c0_19], %55 {strides = array<i32>} : memref<16x128xf32, #tpu.memory_space<vmem>>, vector<16x128xf32>,
    return
  }
  func.func @transform_0(%arg0: i32) -> (i32, i32) {
    %c0_i32 = arith.constant 0 : i32
    %c0_i32_0 = arith.constant 0 : i32
    return %arg0, %c0_i32 : i32, i32
  }
  func.func @transform_1(%arg0: i32) -> (i32, i32) {
    %c0_i32 = arith.constant 0 : i32
    %c0_i32_0 = arith.constant 0 : i32
    %c0_i32_1 = arith.constant 0 : i32
    return %c0_i32, %c0_i32_0 : i32, i32
  }
  func.func @transform_2(%arg0: i32) -> (i32, i32) {
    %c0_i32 = arith.constant 0 : i32
    %c0_i32_0 = arith.constant 0 : i32
    %c0_i32_1 = arith.constant 0 : i32
    return %c0_i32, %c0_i32_0 : i32, i32
  }
  func.func @transform_3(%arg0: i32) -> (i32, i32) {
    %c0_i32 = arith.constant 0 : i32
    %c0_i32_0 = arith.constant 0 : i32
    return %arg0, %c0_i32 : i32, i32
  }
  func.func @transform_4(%arg0: i32) -> (i32, i32) {
    %c0_i32 = arith.constant 0 : i32
    %c0_i32_0 = arith.constant 0 : i32
    return %arg0, %c0_i32 : i32, i32
  }
  func.func @transform_5(%arg0: i32) -> (i32, i32) {
    %c0_i32 = arith.constant 0 : i32
    %c0_i32_0 = arith.constant 0 : i32
    return %arg0, %c0_i32 : i32, i32
  }
  func.func @transform_6(%arg0: i32) -> (i32, i32) {
    %c0_i32 = arith.constant 0 : i32
    %c0_i32_0 = arith.constant 0 : i32
    return %arg0, %c0_i32 : i32, i32
  }
}

module attributes {stable_mosaic.version = 11 : i64} {
  func.func @_mlp_router_kernel(%arg0: i32, %arg1: memref<16x128xbf16, #tpu.memory_space<vmem>>, %arg2: memref<128x384xbf16, #tpu.memory_space<vmem>>, %arg3: memref<128x128xbf16, #tpu.memory_space<vmem>>, %arg4: memref<16x128xbf16, #tpu.memory_space<vmem>>, %arg5: memref<16x128xbf16, #tpu.memory_space<vmem>>) attributes {dimension_semantics = [#tpu.dimension_semantics<parallel>], iteration_bounds = array<i64: 1>, scalar_prefetch = 0 : i64, scratch_operands = 0 : i64, tpu.core_type = #tpu.core_type<tc>, window_params = [{transform_indices = @transform_0, window_bounds = array<i64: 16, 128>}, {pipeline_mode = #tpu.pipeline_mode<synchronous>, transform_indices = @transform_1, window_bounds = array<i64: 128, 384>}, {pipeline_mode = #tpu.pipeline_mode<synchronous>, transform_indices = @transform_2, window_bounds = array<i64: 128, 128>}, {transform_indices = @transform_3, window_bounds = array<i64: 16, 128>}, {transform_indices = @transform_4, window_bounds = array<i64: 16, 128>}]} {
    %c0 = arith.constant 0 : index
    %c0_0 = arith.constant 0 : index
    %0 = vector.load %arg1[%c0, %c0_0] : memref<16x128xbf16, #tpu.memory_space<vmem>>, vector<16x128xbf16>
    %c0_1 = arith.constant 0 : index
    %c0_2 = arith.constant 0 : index
    %1 = vector.load %arg2[%c0_1, %c0_2] : memref<128x384xbf16, #tpu.memory_space<vmem>>, vector<128x384xbf16>
    %cst = arith.constant dense<0.000000e+00> : vector<16x384xf32>
    %2 = tpu.matmul %0, %1, %cst {dimension_numbers = #tpu.dot_dimension_numbers<[1], [0], [0], [1], [0, 0, 1, 1], [], []>} : vector<16x128xbf16>, vector<128x384xbf16>, vector<16x384xf32> -> vector<16x384xf32>
    %3 = vector.extract_strided_slice %2 {offsets = [0, 0], sizes = [16, 128], strides = [1, 1]} : vector<16x384xf32> to vector<16x128xf32>
    %4 = vector.extract_strided_slice %2 {offsets = [0, 128], sizes = [16, 128], strides = [1, 1]} : vector<16x384xf32> to vector<16x128xf32>
    %5 = vector.extract_strided_slice %2 {offsets = [0, 256], sizes = [16, 128], strides = [1, 1]} : vector<16x384xf32> to vector<16x128xf32>
    %6 = arith.negf %3 : vector<16x128xf32>
    %7 = math.exp %6 : vector<16x128xf32>
    %cst_3 = arith.constant 1.000000e+00 : f32
    %8 = vector.broadcast %cst_3 : f32 to vector<16x128xf32>
    %9 = arith.addf %8, %7 : vector<16x128xf32>
    %10 = arith.divf %8, %9 : vector<16x128xf32>
    %11 = arith.mulf %3, %10 : vector<16x128xf32>
    %12 = arith.mulf %11, %4 : vector<16x128xf32>
    %13 = arith.truncf %12 : vector<16x128xf32> to vector<16x128xbf16>
    %c0_4 = arith.constant 0 : index
    %c0_5 = arith.constant 0 : index
    %14 = vector.load %arg3[%c0_4, %c0_5] : memref<128x128xbf16, #tpu.memory_space<vmem>>, vector<128x128xbf16>
    %cst_6 = arith.constant dense<0.000000e+00> : vector<16x128xf32>
    %15 = tpu.matmul %13, %14, %cst_6 {dimension_numbers = #tpu.dot_dimension_numbers<[1], [0], [0], [1], [0, 0, 1, 1], [], []>} : vector<16x128xbf16>, vector<128x128xbf16>, vector<16x128xf32> -> vector<16x128xf32>
    %16 = arith.truncf %15 : vector<16x128xf32> to vector<16x128xbf16>
    %c0_7 = arith.constant 0 : index
    %c0_8 = arith.constant 0 : index
    %17 = vector.load %arg4[%c0_7, %c0_8] : memref<16x128xbf16, #tpu.memory_space<vmem>>, vector<16x128xbf16>
    tpu.vector_store %arg4[%c0_7, %c0_8], %16 {strides = array<i32>} : memref<16x128xbf16, #tpu.memory_space<vmem>>, vector<16x128xbf16>,
    %18 = arith.truncf %5 : vector<16x128xf32> to vector<16x128xbf16>
    %c0_9 = arith.constant 0 : index
    %c0_10 = arith.constant 0 : index
    %19 = vector.load %arg5[%c0_9, %c0_10] : memref<16x128xbf16, #tpu.memory_space<vmem>>, vector<16x128xbf16>
    tpu.vector_store %arg5[%c0_9, %c0_10], %18 {strides = array<i32>} : memref<16x128xbf16, #tpu.memory_space<vmem>>, vector<16x128xbf16>,
    return
  }
  func.func @transform_0(%arg0: i32) -> (i32, i32) {
    %c0_i32 = arith.constant 0 : i32
    %c0_i32_0 = arith.constant 0 : i32
    return %arg0, %c0_i32 : i32, i32
  }
  func.func @transform_1(%arg0: i32) -> (i32, i32) {
    %c0_i32 = arith.constant 0 : i32
    %c0_i32_0 = arith.constant 0 : i32
    %c0_i32_1 = arith.constant 0 : i32
    return %c0_i32, %c0_i32_0 : i32, i32
  }
  func.func @transform_2(%arg0: i32) -> (i32, i32) {
    %c0_i32 = arith.constant 0 : i32
    %c0_i32_0 = arith.constant 0 : i32
    %c0_i32_1 = arith.constant 0 : i32
    return %c0_i32, %c0_i32_0 : i32, i32
  }
  func.func @transform_3(%arg0: i32) -> (i32, i32) {
    %c0_i32 = arith.constant 0 : i32
    %c0_i32_0 = arith.constant 0 : i32
    return %arg0, %c0_i32 : i32, i32
  }
  func.func @transform_4(%arg0: i32) -> (i32, i32) {
    %c0_i32 = arith.constant 0 : i32
    %c0_i32_0 = arith.constant 0 : i32
    return %arg0, %c0_i32 : i32, i32
  }
}

module attributes {stable_mosaic.version = 11 : i64} {
  func.func @_expert_mix_kernel(%arg0: i32, %arg1: memref<16x128xbf16, #tpu.memory_space<vmem>>, %arg2: memref<128x128xbf16, #tpu.memory_space<vmem>>, %arg3: memref<128x128xbf16, #tpu.memory_space<vmem>>, %arg4: memref<16x128xi32, #tpu.memory_space<vmem>>, %arg5: memref<16x128xf32, #tpu.memory_space<vmem>>, %arg6: memref<16x128xbf16, #tpu.memory_space<vmem>>, %arg7: memref<16x128xf32, #tpu.memory_space<vmem>>) attributes {dimension_semantics = [#tpu.dimension_semantics<parallel>], iteration_bounds = array<i64: 1>, scalar_prefetch = 0 : i64, scratch_operands = 0 : i64, tpu.core_type = #tpu.core_type<tc>, window_params = [{transform_indices = @transform_0, window_bounds = array<i64: 16, 128>}, {pipeline_mode = #tpu.pipeline_mode<synchronous>, transform_indices = @transform_1, window_bounds = array<i64: 128, 128>}, {pipeline_mode = #tpu.pipeline_mode<synchronous>, transform_indices = @transform_2, window_bounds = array<i64: 128, 128>}, {transform_indices = @transform_3, window_bounds = array<i64: 16, 128>}, {transform_indices = @transform_4, window_bounds = array<i64: 16, 128>}, {transform_indices = @transform_5, window_bounds = array<i64: 16, 128>}, {transform_indices = @transform_6, window_bounds = array<i64: 16, 128>}]} {
    %c0 = arith.constant 0 : index
    %c0_0 = arith.constant 0 : index
    %0 = vector.load %arg1[%c0, %c0_0] : memref<16x128xbf16, #tpu.memory_space<vmem>>, vector<16x128xbf16>
    %c0_1 = arith.constant 0 : index
    %c0_2 = arith.constant 0 : index
    %1 = vector.load %arg2[%c0_1, %c0_2] : memref<128x128xbf16, #tpu.memory_space<vmem>>, vector<128x128xbf16>
    %cst = arith.constant dense<0.000000e+00> : vector<16x128xf32>
    %2 = tpu.matmul %0, %1, %cst {dimension_numbers = #tpu.dot_dimension_numbers<[1], [1], [0], [0], [0, 0, 1, 0], [], []>} : vector<16x128xbf16>, vector<128x128xbf16>, vector<16x128xf32> -> vector<16x128xf32>
    %3 = arith.negf %2 : vector<16x128xf32>
    %4 = math.exp %3 : vector<16x128xf32>
    %cst_3 = arith.constant 1.000000e+00 : f32
    %5 = vector.broadcast %cst_3 : f32 to vector<16x128xf32>
    %6 = arith.addf %5, %4 : vector<16x128xf32>
    %7 = arith.divf %5, %6 : vector<16x128xf32>
    %8 = arith.mulf %2, %7 : vector<16x128xf32>
    %c0_4 = arith.constant 0 : index
    %c0_5 = arith.constant 0 : index
    %9 = vector.load %arg4[%c0_4, %c0_5] : memref<16x128xi32, #tpu.memory_space<vmem>>, vector<16x128xi32>
    %c0_6 = arith.constant 0 : index
    %c0_7 = arith.constant 0 : index
    %10 = vector.load %arg5[%c0_6, %c0_7] : memref<16x128xf32, #tpu.memory_space<vmem>>, vector<16x128xf32>
    %11 = tpu.iota {dimensions = array<i32: 1>} : vector<16x128xi32>
    %cst_8 = arith.constant 0.000000e+00 : f32
    %12 = vector.broadcast %cst_8 : f32 to vector<16x128xf32>
    %13 = vector.extract_strided_slice %9 {offsets = [0, 0], sizes = [16, 1], strides = [1, 1]} : vector<16x128xi32> to vector<16x1xi32>
    %14 = vector.broadcast %13 : vector<16x1xi32> to vector<16x128xi32>
    %15 = arith.cmpi eq, %11, %14 : vector<16x128xi32>
    %16 = vector.extract_strided_slice %10 {offsets = [0, 0], sizes = [16, 1], strides = [1, 1]} : vector<16x128xf32> to vector<16x1xf32>
    %cst_9 = arith.constant 0.000000e+00 : f32
    %17 = vector.shape_cast %16 : vector<16x1xf32> to vector<16x1xf32>
    %18 = vector.broadcast %17 : vector<16x1xf32> to vector<16x128xf32>
    %19 = vector.broadcast %cst_9 : f32 to vector<16x128xf32>
    %20 = arith.select %15, %18, %19 : vector<16x128xi1>, vector<16x128xf32>
    %21 = arith.addf %12, %20 : vector<16x128xf32>
    %22 = vector.extract_strided_slice %9 {offsets = [0, 1], sizes = [16, 1], strides = [1, 1]} : vector<16x128xi32> to vector<16x1xi32>
    %23 = vector.broadcast %22 : vector<16x1xi32> to vector<16x128xi32>
    %24 = arith.cmpi eq, %11, %23 : vector<16x128xi32>
    %25 = vector.extract_strided_slice %10 {offsets = [0, 1], sizes = [16, 1], strides = [1, 1]} : vector<16x128xf32> to vector<16x1xf32>
    %cst_10 = arith.constant 0.000000e+00 : f32
    %26 = vector.shape_cast %25 : vector<16x1xf32> to vector<16x1xf32>
    %27 = vector.broadcast %26 : vector<16x1xf32> to vector<16x128xf32>
    %28 = vector.broadcast %cst_10 : f32 to vector<16x128xf32>
    %29 = arith.select %24, %27, %28 : vector<16x128xi1>, vector<16x128xf32>
    %30 = arith.addf %21, %29 : vector<16x128xf32>
    %31 = vector.extract_strided_slice %9 {offsets = [0, 2], sizes = [16, 1], strides = [1, 1]} : vector<16x128xi32> to vector<16x1xi32>
    %32 = vector.broadcast %31 : vector<16x1xi32> to vector<16x128xi32>
    %33 = arith.cmpi eq, %11, %32 : vector<16x128xi32>
    %34 = vector.extract_strided_slice %10 {offsets = [0, 2], sizes = [16, 1], strides = [1, 1]} : vector<16x128xf32> to vector<16x1xf32>
    %cst_11 = arith.constant 0.000000e+00 : f32
    %35 = vector.shape_cast %34 : vector<16x1xf32> to vector<16x1xf32>
    %36 = vector.broadcast %35 : vector<16x1xf32> to vector<16x128xf32>
    %37 = vector.broadcast %cst_11 : f32 to vector<16x128xf32>
    %38 = arith.select %33, %36, %37 : vector<16x128xi1>, vector<16x128xf32>
    %39 = arith.addf %30, %38 : vector<16x128xf32>
    %40 = vector.extract_strided_slice %9 {offsets = [0, 3], sizes = [16, 1], strides = [1, 1]} : vector<16x128xi32> to vector<16x1xi32>
    %41 = vector.broadcast %40 : vector<16x1xi32> to vector<16x128xi32>
    %42 = arith.cmpi eq, %11, %41 : vector<16x128xi32>
    %43 = vector.extract_strided_slice %10 {offsets = [0, 3], sizes = [16, 1], strides = [1, 1]} : vector<16x128xf32> to vector<16x1xf32>
    %cst_12 = arith.constant 0.000000e+00 : f32
    %44 = vector.shape_cast %43 : vector<16x1xf32> to vector<16x1xf32>
    %45 = vector.broadcast %44 : vector<16x1xf32> to vector<16x128xf32>
    %46 = vector.broadcast %cst_12 : f32 to vector<16x128xf32>
    %47 = arith.select %42, %45, %46 : vector<16x128xi1>, vector<16x128xf32>
    %48 = arith.addf %39, %47 : vector<16x128xf32>
    %49 = arith.mulf %8, %48 : vector<16x128xf32>
    %c0_13 = arith.constant 0 : index
    %c0_14 = arith.constant 0 : index
    %50 = vector.load %arg3[%c0_13, %c0_14] : memref<128x128xbf16, #tpu.memory_space<vmem>>, vector<128x128xbf16>
    %51 = arith.extf %50 : vector<128x128xbf16> to vector<128x128xf32>
    %cst_15 = arith.constant dense<0.000000e+00> : vector<16x128xf32>
    %52 = tpu.matmul %49, %51, %cst_15 {dimension_numbers = #tpu.dot_dimension_numbers<[1], [0], [0], [1], [0, 0, 1, 1], [], []>} : vector<16x128xf32>, vector<128x128xf32>, vector<16x128xf32> -> vector<16x128xf32>
    %c0_16 = arith.constant 0 : index
    %c0_17 = arith.constant 0 : index
    %53 = vector.load %arg6[%c0_16, %c0_17] : memref<16x128xbf16, #tpu.memory_space<vmem>>, vector<16x128xbf16>
    %54 = arith.extf %53 : vector<16x128xbf16> to vector<16x128xf32>
    %55 = arith.addf %54, %52 : vector<16x128xf32>
    %c0_18 = arith.constant 0 : index
    %c0_19 = arith.constant 0 : index
    %56 = vector.load %arg7[%c0_18, %c0_19] : memref<16x128xf32, #tpu.memory_space<vmem>>, vector<16x128xf32>
    tpu.vector_store %arg7[%c0_18, %c0_19], %55 {strides = array<i32>} : memref<16x128xf32, #tpu.memory_space<vmem>>, vector<16x128xf32>,
    return
  }
  func.func @transform_0(%arg0: i32) -> (i32, i32) {
    %c0_i32 = arith.constant 0 : i32
    %c0_i32_0 = arith.constant 0 : i32
    return %arg0, %c0_i32 : i32, i32
  }
  func.func @transform_1(%arg0: i32) -> (i32, i32) {
    %c0_i32 = arith.constant 0 : i32
    %c0_i32_0 = arith.constant 0 : i32
    %c0_i32_1 = arith.constant 0 : i32
    return %c0_i32, %c0_i32_0 : i32, i32
  }
  func.func @transform_2(%arg0: i32) -> (i32, i32) {
    %c0_i32 = arith.constant 0 : i32
    %c0_i32_0 = arith.constant 0 : i32
    %c0_i32_1 = arith.constant 0 : i32
    return %c0_i32, %c0_i32_0 : i32, i32
  }
  func.func @transform_3(%arg0: i32) -> (i32, i32) {
    %c0_i32 = arith.constant 0 : i32
    %c0_i32_0 = arith.constant 0 : i32
    return %arg0, %c0_i32 : i32, i32
  }
  func.func @transform_4(%arg0: i32) -> (i32, i32) {
    %c0_i32 = arith.constant 0 : i32
    %c0_i32_0 = arith.constant 0 : i32
    return %arg0, %c0_i32 : i32, i32
  }
  func.func @transform_5(%arg0: i32) -> (i32, i32) {
    %c0_i32 = arith.constant 0 : i32
    %c0_i32_0 = arith.constant 0 : i32
    return %arg0, %c0_i32 : i32, i32
  }
  func.func @transform_6(%arg0: i32) -> (i32, i32) {
    %c0_i32 = arith.constant 0 : i32
    %c0_i32_0 = arith.constant 0 : i32
    return %arg0, %c0_i32 : i32, i32
  }
}

</mosaic_0001>

<llo_original>
// kernel: doge_cdmoe_forward.2
$region0: #{doge_cdmoe_forward.2}
  #allocation0 [shape = 'u32[]', space=smem, size = 0x4, offset = 0x4, fixed_abs, tag = 'smem constant byte address 0x4 - core index']
  #allocation1 [shape = 'u32[144,128]{1,0:T(1,128)}', space=vmem, size = 0x12000, scoped, tag = 'internal scratch']
  %s0 = inlined_call_operand.vmem [shape: bf16[16,128], index: 0, kind: input, shape index: {}]
  %s1 = inlined_call_operand.hbm [shape: bf16[128,384], index: 1, kind: input, shape index: {}]
  %s2 = inlined_call_operand.hbm [shape: bf16[128,128], index: 2, kind: input, shape index: {}]
  %s3 = inlined_call_operand.vmem [shape: bf16[16,128], index: 3, kind: output, shape index: {0}]
  %s4 = inlined_call_operand.vmem [shape: bf16[16,128], index: 4, kind: output, shape index: {1}]
  %5 = xla_tuple %s3, %s4
  %s6 = sld [smem:[#allocation0]]
  $region38: #{doge_cdmoe_forward.2} parent=0
    _
  %s8 = ssub.s32 1, %s6
  %s9 = scalar_select 0, %s8, %s6
  $region1: #{doge_cdmoe_forward.2} parent=0
    #allocation2 [shape = 'u8[98304]{0}', space=vmem, size = 0x18000, scoped, tag = 'input window, operand 1, single buffered']
    #allocation3 [shape = 's32[1]{0}', space=sflag, size = 0x4, scoped, tag = 'scoped memory for doge_cdmoe_forward.2']
    #allocation4 [shape = 'u8[32768]{0}', space=vmem, size = 0x8000, scoped, tag = 'input window, operand 2, single buffered']
    #allocation5 [shape = 's32[1]{0}', space=sflag, size = 0x4, scoped, tag = 'scoped memory for doge_cdmoe_forward.2']
    %10 = vsyncpa [#allocation3], 0
    %11 = vsyncpa [#allocation5], 0
    // Predicated region
    $region2: #{doge_cdmoe_forward.2} parent=1 // pred_check
      _
    $region3: #{doge_cdmoe_forward.2} parent=1 // pred_check_branch
      %13 = sbr.rel (0) target = $region5
    $region4: #{doge_cdmoe_forward.2} parent=1 // pred_region
      _
    $region5: #{doge_cdmoe_forward.2} parent=1 // pred_fallthru
      _
    // Predicated region
    $region6: #{doge_cdmoe_forward.2} parent=1 // pred_check
      _
    $region7: #{doge_cdmoe_forward.2} parent=1 // pred_check_branch
      %15 = sbr.rel (0) target = $region9
    $region8: #{doge_cdmoe_forward.2} parent=1 // pred_region
      %s17 = ssub.s32 3072, 3072
      %18 = vsyncadd [#allocation3], %s17
      %s19 = sshll.u32 [#allocation2], 4
      %s20 = int_to_ptr.vmem [resolvable:$true] %s19
      %25 = dma.hbm_to_vmem [thread:$0]  %s1, 3072, %s20, [#allocation3], 192, 192, 12
    $region9: #{doge_cdmoe_forward.2} parent=1 // pred_fallthru
      _
    // Predicated region
    $region10: #{doge_cdmoe_forward.2} parent=1 // pred_check
      _
    $region11: #{doge_cdmoe_forward.2} parent=1 // pred_check_branch
      %27 = sbr.rel (0) target = $region13
    $region12: #{doge_cdmoe_forward.2} parent=1 // pred_region
      %s29 = ssub.s32 1024, 1024
      %30 = vsyncadd [#allocation5], %s29
      %s31 = sshll.u32 [#allocation4], 4
      %s32 = int_to_ptr.vmem [resolvable:$true] %s31
      %37 = dma.hbm_to_vmem [thread:$0]  %s2, 1024, %s32, [#allocation5], 64, 64, 4
    $region13: #{doge_cdmoe_forward.2} parent=1 // pred_fallthru
      _
    // Predicated region
    $region14: #{doge_cdmoe_forward.2} parent=1 // pred_check
      _
    $region15: #{doge_cdmoe_forward.2} parent=1 // pred_check_branch
      %39 = sbr.rel (0) target = $region17
    $region16: #{doge_cdmoe_forward.2} parent=1 // pred_region
      %40 = dma.done [#allocation3], 3072
    $region17: #{doge_cdmoe_forward.2} parent=1 // pred_fallthru
      _
    // Predicated region
    $region18: #{doge_cdmoe_forward.2} parent=1 // pred_check
      _
    $region19: #{doge_cdmoe_forward.2} parent=1 // pred_check_branch
      %42 = sbr.rel (0) target = $region21
    $region20: #{doge_cdmoe_forward.2} parent=1 // pred_region
      %43 = dma.done [#allocation5], 1024
    $region21: #{doge_cdmoe_forward.2} parent=1 // pred_fallthru
      _
    %v45 = vld [vmem:[%s0] sm:$0xf]
    %v46 = vld [vmem:[%s0 + $0x4] sm:$0xf]
    %v47 = vld [vmem:[#allocation2] sm:$0xff]
    %v48 = vld [vmem:[#allocation2 + $0x8] sm:$0xf]
    %v49 = vld [vmem:[#allocation2 + $0xc] sm:$0xff]
    %v50 = vld [vmem:[#allocation2 + $0x14] sm:$0xf]
    %v51 = vld [vmem:[#allocation2 + $0x18] sm:$0xff]
    %v52 = vld [vmem:[#allocation2 + $0x20] sm:$0xf]
    %v53 = vld [vmem:[#allocation2 + $0x24] sm:$0xff]
    %v54 = vld [vmem:[#allocation2 + $0x2c] sm:$0xf]
    %v55 = vld [vmem:[#allocation2 + $0x30] sm:$0xff]
    %v56 = vld [vmem:[#allocation2 + $0x38] sm:$0xf]
    %v57 = vld [vmem:[#allocation2 + $0x3c] sm:$0xff]
    %v58 = vld [vmem:[#allocation2 + $0x44] sm:$0xf]
    %v59 = vld [vmem:[#allocation2 + $0x48] sm:$0xff]
    %v60 = vld [vmem:[#allocation2 + $0x50] sm:$0xf]
    %v61 = vld [vmem:[#allocation2 + $0x54] sm:$0xff]
    %v62 = vld [vmem:[#allocation2 + $0x5c] sm:$0xf]
    %v63 = vld [vmem:[#allocation2 + $0x60] sm:$0xff]
    %v64 = vld [vmem:[#allocation2 + $0x68] sm:$0xf]
    %v65 = vld [vmem:[#allocation2 + $0x6c] sm:$0xff]
    %v66 = vld [vmem:[#allocation2 + $0x74] sm:$0xf]
    %v67 = vld [vmem:[#allocation2 + $0x78] sm:$0xff]
    %v68 = vld [vmem:[#allocation2 + $0x80] sm:$0xf]
    %v69 = vld [vmem:[#allocation2 + $0x84] sm:$0xff]
    %v70 = vld [vmem:[#allocation2 + $0x8c] sm:$0xf]
    %v71 = vld [vmem:[#allocation2 + $0x90] sm:$0xff]
    %v72 = vld [vmem:[#allocation2 + $0x98] sm:$0xf]
    %v73 = vld [vmem:[#allocation2 + $0x9c] sm:$0xff]
    %v74 = vld [vmem:[#allocation2 + $0xa4] sm:$0xf]
    %v75 = vld [vmem:[#allocation2 + $0xa8] sm:$0xff]
    %v76 = vld [vmem:[#allocation2 + $0xb0] sm:$0xf]
    %v77 = vld [vmem:[#allocation2 + $0xb4] sm:$0xff]
    %v78 = vld [vmem:[#allocation2 + $0xbc] sm:$0xf]
    %v81 = vunpack.c.l.b16 %v45
    %v82 = vunpack.c.l.b16 %v46
    %v83 = vpack.c.b16 %v82, %v81
    %v117 = vunpack.c.l.b16 %v47
    %v118 = vunpack.c.h.b16 %v47
    %v119 = vunpack.c.l.b16 %v48
    %v120 = vunpack.c.l.b16 %v49
    %v121 = vunpack.c.h.b16 %v49
    %v122 = vunpack.c.l.b16 %v50
    %v123 = vunpack.c.l.b16 %v51
    %v124 = vunpack.c.h.b16 %v51
    %v125 = vunpack.c.l.b16 %v52
    %v126 = vunpack.c.l.b16 %v53
    %v127 = vunpack.c.h.b16 %v53
    %v128 = vunpack.c.l.b16 %v54
    %v129 = vunpack.c.l.b16 %v55
    %v130 = vunpack.c.h.b16 %v55
    %v131 = vunpack.c.l.b16 %v56
    %v132 = vunpack.c.l.b16 %v57
    %v133 = vunpack.c.h.b16 %v57
    %v134 = vunpack.c.l.b16 %v58
    %v135 = vunpack.c.l.b16 %v59
    %v136 = vunpack.c.h.b16 %v59
    %v137 = vunpack.c.l.b16 %v60
    %v138 = vunpack.c.l.b16 %v61
    %v139 = vunpack.c.h.b16 %v61
    %v140 = vunpack.c.l.b16 %v62
    %v141 = vunpack.c.l.b16 %v63
    %v142 = vunpack.c.h.b16 %v63
    %v143 = vunpack.c.l.b16 %v64
    %v144 = vunpack.c.l.b16 %v65
    %v145 = vunpack.c.h.b16 %v65
    %v146 = vunpack.c.l.b16 %v66
    %v147 = vunpack.c.l.b16 %v67
    %v148 = vunpack.c.h.b16 %v67
    %v149 = vunpack.c.l.b16 %v68
    %v150 = vunpack.c.l.b16 %v69
    %v151 = vunpack.c.h.b16 %v69
    %v152 = vunpack.c.l.b16 %v70
    %v153 = vunpack.c.l.b16 %v71
    %v154 = vunpack.c.h.b16 %v71
    %v155 = vunpack.c.l.b16 %v72
    %v156 = vunpack.c.l.b16 %v73
    %v157 = vunpack.c.h.b16 %v73
    %v158 = vunpack.c.l.b16 %v74
    %v159 = vunpack.c.l.b16 %v75
    %v160 = vunpack.c.h.b16 %v75
    %v161 = vunpack.c.l.b16 %v76
    %v162 = vunpack.c.l.b16 %v77
    %v163 = vunpack.c.h.b16 %v77
    %v164 = vunpack.c.l.b16 %v78
    %v165 = vpack.c.b16 %v120, %v117
    %v166 = vpack.c.b16 %v121, %v118
    %v167 = vpack.c.b16 %v122, %v119
    %v168 = vpack.c.b16 %v126, %v123
    %v169 = vpack.c.b16 %v127, %v124
    %v170 = vpack.c.b16 %v128, %v125
    %v171 = vpack.c.b16 %v132, %v129
    %v172 = vpack.c.b16 %v133, %v130
    %v173 = vpack.c.b16 %v134, %v131
    %v174 = vpack.c.b16 %v138, %v135
    %v175 = vpack.c.b16 %v139, %v136
    %v176 = vpack.c.b16 %v140, %v137
    %v177 = vpack.c.b16 %v144, %v141
    %v178 = vpack.c.b16 %v145, %v142
    %v179 = vpack.c.b16 %v146, %v143
    %v180 = vpack.c.b16 %v150, %v147
    %v181 = vpack.c.b16 %v151, %v148
    %v182 = vpack.c.b16 %v152, %v149
    %v183 = vpack.c.b16 %v156, %v153
    %v184 = vpack.c.b16 %v157, %v154
    %v185 = vpack.c.b16 %v158, %v155
    %v186 = vpack.c.b16 %v162, %v159
    %v187 = vpack.c.b16 %v163, %v160
    %v188 = vpack.c.b16 %v164, %v161
    %213 = vmatprep.subr.bf16.mxu0 %v166
    %214 = vmatpush1.bf16.msra.mxu0 %v165
    %215 = vmatprep.subr.bf16.mxu0 %v169
    %216 = vmatpush1.bf16.msra.mxu0 %v168
    %217 = vmatprep.subr.bf16.mxu0 %v172
    %218 = vmatpush1.bf16.msra.mxu0 %v171
    %219 = vmatprep.subr.bf16.mxu0 %v175
    %220 = vmatpush1.bf16.msra.mxu0 %v174
    %221 = vmatprep.subr.bf16.mxu0 %v178
    %222 = vmatpush1.bf16.msra.mxu0 %v177
    %223 = vmatprep.subr.bf16.mxu0 %v181
    %224 = vmatpush1.bf16.msra.mxu0 %v180
    %225 = vmatprep.subr.bf16.mxu0 %v184
    %226 = vmatpush1.bf16.msra.mxu0 %v183
    %227 = vmatprep.subr.bf16.mxu0 %v187
    %228 = vmatpush1.bf16.msra.mxu0 %v186
    %229 = vmatprep.subr.bf16.mxu0 0
    %230 = vmatpush1.bf16.msra.mxu0 0
    %231 = vmatprep.subr.bf16.mxu0 0
    %232 = vmatpush1.bf16.msra.mxu0 0
    %233 = vmatprep.subr.bf16.mxu0 0
    %234 = vmatpush1.bf16.msra.mxu0 0
    %235 = vmatprep.subr.bf16.mxu0 0
    %236 = vmatpush1.bf16.msra.mxu0 0
    %237 = vmatprep.subr.bf16.mxu0 0
    %238 = vmatpush1.bf16.msra.mxu0 0
    %239 = vmatprep.subr.bf16.mxu0 0
    %240 = vmatpush1.bf16.msra.mxu0 0
    %241 = vmatprep.subr.bf16.mxu0 0
    %242 = vmatpush1.bf16.msra.mxu0 0
    %243 = vmatprep.subr.bf16.mxu0 0
    %244 = vmatpush1.bf16.msra.mxu0 0
    %245 = vmatprep.mubr.bf16.mxu0 0
    %246 = vmatmul.mubr.bf16.gmra.mrb[0].mxu0 %v83
    %v247 = vpop.f32.mrb[0].mxu0
    %v248 = vadd.f32 0.0, %v247
    %v249 = vpop.f32.mrb[0].mxu0
    %v250 = vadd.f32 0.0, %v249
    %v251 = vpop.f32.mrb[0].mxu0
    %v252 = vadd.f32 0.0, %v251
    %v253 = vpop.f32.mrb[0].mxu0
    %v254 = vadd.f32 0.0, %v253
    %255 = vdwg.mxu0
    %256 = vmatprep.subr.bf16.mxu0 0
    %257 = vmatpush1.bf16.msra.mxu0 %v167
    %258 = vmatprep.subr.bf16.mxu0 0
    %259 = vmatpush1.bf16.msra.mxu0 %v170
    %260 = vmatprep.subr.bf16.mxu0 0
    %261 = vmatpush1.bf16.msra.mxu0 %v173
    %262 = vmatprep.subr.bf16.mxu0 0
    %263 = vmatpush1.bf16.msra.mxu0 %v176
    %264 = vmatprep.subr.bf16.mxu0 0
    %265 = vmatpush1.bf16.msra.mxu0 %v179
    %266 = vmatprep.subr.bf16.mxu0 0
    %267 = vmatpush1.bf16.msra.mxu0 %v182
    %268 = vmatprep.subr.bf16.mxu0 0
    %269 = vmatpush1.bf16.msra.mxu0 %v185
    %270 = vmatprep.subr.bf16.mxu0 0
    %271 = vmatpush1.bf16.msra.mxu0 %v188
    %272 = vmatprep.subr.bf16.mxu0 0
    %273 = vmatpush1.bf16.msra.mxu0 0
    %274 = vmatprep.subr.bf16.mxu0 0
    %275 = vmatpush1.bf16.msra.mxu0 0
    %276 = vmatprep.subr.bf16.mxu0 0
    %277 = vmatpush1.bf16.msra.mxu0 0
    %278 = vmatprep.subr.bf16.mxu0 0
    %279 = vmatpush1.bf16.msra.mxu0 0
    %280 = vmatprep.subr.bf16.mxu0 0
    %281 = vmatpush1.bf16.msra.mxu0 0
    %282 = vmatprep.subr.bf16.mxu0 0
    %283 = vmatpush1.bf16.msra.mxu0 0
    %284 = vmatprep.subr.bf16.mxu0 0
    %285 = vmatpush1.bf16.msra.mxu0 0
    %286 = vmatprep.subr.bf16.mxu0 0
    %287 = vmatpush1.bf16.msra.mxu0 0
    %288 = vmatprep.mubr.bf16.mxu0 0
    %289 = vmatmul.mubr.bf16.gmra.mrb[0].mxu0 %v83
    %v290 = vpop.f32.mrb[0].mxu0
    %v291 = vadd.f32 0.0, %v290
    %v292 = vpop.f32.mrb[0].mxu0
    %v293 = vpop.f32.mrb[0].mxu0
    %v294 = vadd.f32 0.0, %v293
    %v295 = vpop.f32.mrb[0].mxu0
    %296 = vdwg.mxu0
    %v297 = vxor.u32 %v248, 2147483648
    %v298 = vxor.u32 %v252, 2147483648
    %v299 = vmul.f32 %v297, 1.442695
    %v300 = vpow.pop %v299
    %v301 = vmul.f32 %v298, 1.442695
    %v302 = vpow.pop %v301
    %v303 = vadd.f32 %v300, 1.0
    %v304 = vadd.f32 %v302, 1.0
    %v305 = vrcp.pop %v303
    %v306 = vmul.f32 1.0, %v305
    %v307 = vrcp.pop %v304
    %v308 = vmul.f32 1.0, %v307
    %v309 = vmul.f32 %v248, %v306
    %v310 = vmul.f32 %v252, %v308
    %v311 = vmul.f32 %v309, %v250
    %v312 = vmul.f32 %v310, %v254
    %v313 = vpack.c.bf16 %v312, %v311
    %v314 = vld [vmem:[#allocation4] sm:$0xf]
    %v315 = vld [vmem:[#allocation4 + $0x4] sm:$0xf]
    %v316 = vld [vmem:[#allocation4 + $0x8] sm:$0xf]
    %v317 = vld [vmem:[#allocation4 + $0xc] sm:$0xf]
    %v318 = vld [vmem:[#allocation4 + $0x10] sm:$0xf]
    %v319 = vld [vmem:[#allocation4 + $0x14] sm:$0xf]
    %v320 = vld [vmem:[#allocation4 + $0x18] sm:$0xf]
    %v321 = vld [vmem:[#allocation4 + $0x1c] sm:$0xf]
    %v322 = vld [vmem:[#allocation4 + $0x20] sm:$0xf]
    %v323 = vld [vmem:[#allocation4 + $0x24] sm:$0xf]
    %v324 = vld [vmem:[#allocation4 + $0x28] sm:$0xf]
    %v325 = vld [vmem:[#allocation4 + $0x2c] sm:$0xf]
    %v326 = vld [vmem:[#allocation4 + $0x30] sm:$0xf]
    %v327 = vld [vmem:[#allocation4 + $0x34] sm:$0xf]
    %v328 = vld [vmem:[#allocation4 + $0x38] sm:$0xf]
    %v329 = vld [vmem:[#allocation4 + $0x3c] sm:$0xf]
    %v346 = vunpack.c.l.b16 %v314
    %v347 = vunpack.c.l.b16 %v315
    %v348 = vunpack.c.l.b16 %v316
    %v349 = vunpack.c.l.b16 %v317
    %v350 = vunpack.c.l.b16 %v318
    %v351 = vunpack.c.l.b16 %v319
    %v352 = vunpack.c.l.b16 %v320
    %v353 = vunpack.c.l.b16 %v321
    %v354 = vunpack.c.l.b16 %v322
    %v355 = vunpack.c.l.b16 %v323
    %v356 = vunpack.c.l.b16 %v324
    %v357 = vunpack.c.l.b16 %v325
    %v358 = vunpack.c.l.b16 %v326
    %v359 = vunpack.c.l.b16 %v327
    %v360 = vunpack.c.l.b16 %v328
    %v361 = vunpack.c.l.b16 %v329
    %v362 = vpack.c.b16 %v347, %v346
    %v363 = vpack.c.b16 %v349, %v348
    %v364 = vpack.c.b16 %v351, %v350
    %v365 = vpack.c.b16 %v353, %v352
    %v366 = vpack.c.b16 %v355, %v354
    %v367 = vpack.c.b16 %v357, %v356
    %v368 = vpack.c.b16 %v359, %v358
    %v369 = vpack.c.b16 %v361, %v360
    %378 = vmatprep.subr.bf16.mxu0 0
    %379 = vmatpush1.bf16.msra.mxu0 %v362
    %380 = vmatprep.subr.bf16.mxu0 0
    %381 = vmatpush1.bf16.msra.mxu0 %v363
    %382 = vmatprep.subr.bf16.mxu0 0
    %383 = vmatpush1.bf16.msra.mxu0 %v364
    %384 = vmatprep.subr.bf16.mxu0 0
    %385 = vmatpush1.bf16.msra.mxu0 %v365
    %386 = vmatprep.subr.bf16.mxu0 0
    %387 = vmatpush1.bf16.msra.mxu0 %v366
    %388 = vmatprep.subr.bf16.mxu0 0
    %389 = vmatpush1.bf16.msra.mxu0 %v367
    %390 = vmatprep.subr.bf16.mxu0 0
    %391 = vmatpush1.bf16.msra.mxu0 %v368
    %392 = vmatprep.subr.bf16.mxu0 0
    %393 = vmatpush1.bf16.msra.mxu0 %v369
    %394 = vmatprep.subr.bf16.mxu0 0
    %395 = vmatpush1.bf16.msra.mxu0 0
    %396 = vmatprep.subr.bf16.mxu0 0
    %397 = vmatpush1.bf16.msra.mxu0 0
    %398 = vmatprep.subr.bf16.mxu0 0
    %399 = vmatpush1.bf16.msra.mxu0 0
    %400 = vmatprep.subr.bf16.mxu0 0
    %401 = vmatpush1.bf16.msra.mxu0 0
    %402 = vmatprep.subr.bf16.mxu0 0
    %403 = vmatpush1.bf16.msra.mxu0 0
    %404 = vmatprep.subr.bf16.mxu0 0
    %405 = vmatpush1.bf16.msra.mxu0 0
    %406 = vmatprep.subr.bf16.mxu0 0
    %407 = vmatpush1.bf16.msra.mxu0 0
    %408 = vmatprep.subr.bf16.mxu0 0
    %409 = vmatpush1.bf16.msra.mxu0 0
    %410 = vmatprep.mubr.bf16.mxu0 0
    %411 = vmatmul.mubr.bf16.gmra.mrb[0].mxu0 %v313
    %v412 = vpop.f32.mrb[0].mxu0
    %v413 = vadd.f32 0.0, %v412
    %v414 = vpop.f32.mrb[0].mxu0
    %v415 = vpop.f32.mrb[0].mxu0
    %v416 = vadd.f32 0.0, %v415
    %v417 = vpop.f32.mrb[0].mxu0
    %418 = vdwg.mxu0
    %v419 = vpack.c.bf16 %v416, %v413
    %v421 = vunpack.c.l.b16 %v419
    %v422 = vunpack.c.h.b16 %v419
    %v423 = vpack.c.b16 %v421, %v421
    %v424 = vpack.c.b16 %v422, %v422
    %427 = vst [vmem:[%s3] sm:$0xf] %v423
    %428 = vst [vmem:[%s3 + $0x4] sm:$0xf] %v424
    %v429 = vpack.c.bf16 %v294, %v291
    %v431 = vunpack.c.l.b16 %v429
    %v432 = vunpack.c.h.b16 %v429
    %v433 = vpack.c.b16 %v431, %v431
    %v434 = vpack.c.b16 %v432, %v432
    %437 = vst [vmem:[%s4] sm:$0xf] %v433
    %438 = vst [vmem:[%s4 + $0x4] sm:$0xf] %v434
    // Predicated region
    $region22: #{doge_cdmoe_forward.2} parent=1 // pred_check
      _
    $region23: #{doge_cdmoe_forward.2} parent=1 // pred_check_branch
      %440 = sbr.rel (0) target = $region25
    $region24: #{doge_cdmoe_forward.2} parent=1 // pred_region
      _
    $region25: #{doge_cdmoe_forward.2} parent=1 // pred_fallthru
      _
    // Predicated region
    $region26: #{doge_cdmoe_forward.2} parent=1 // pred_check
      _
    $region27: #{doge_cdmoe_forward.2} parent=1 // pred_check_branch
      %442 = sbr.rel (0) target = $region29
    $region28: #{doge_cdmoe_forward.2} parent=1 // pred_region
      _
    $region29: #{doge_cdmoe_forward.2} parent=1 // pred_fallthru
      _
    // Predicated region
    $region30: #{doge_cdmoe_forward.2} parent=1 // pred_check
      _
    $region31: #{doge_cdmoe_forward.2} parent=1 // pred_check_branch
      %444 = sbr.rel (0) target = $region33
    $region32: #{doge_cdmoe_forward.2} parent=1 // pred_region
      _
    $region33: #{doge_cdmoe_forward.2} parent=1 // pred_fallthru
      _
    // Predicated region
    $region34: #{doge_cdmoe_forward.2} parent=1 // pred_check
      _
    $region35: #{doge_cdmoe_forward.2} parent=1 // pred_check_branch
      %446 = sbr.rel (0) target = $region37
    $region36: #{doge_cdmoe_forward.2} parent=1 // pred_region
      _
    $region37: #{doge_cdmoe_forward.2} parent=1 // pred_fallthru
      _
    %447 = vsyncpa [#allocation3], 1
    %448 = vsyncpa [#allocation5], 1

// kernel: doge_cdmoe_forward.3
$region0: #{doge_cdmoe_forward.3}
  #allocation0 [shape = 'u32[]', space=smem, size = 0x4, offset = 0x4, fixed_abs, tag = 'smem constant byte address 0x4 - core index']
  #allocation1 [shape = 'u32[144,128]{1,0:T(1,128)}', space=vmem, size = 0x12000, scoped, tag = 'internal scratch']
  %s0 = inlined_call_operand.vmem [shape: bf16[16,128], index: 0, kind: input, shape index: {}]
  %s1 = inlined_call_operand.vmem [shape: bf16[128,128], index: 1, kind: input, shape index: {}]
  %s2 = inlined_call_operand.vmem [shape: bf16[128,128], index: 2, kind: input, shape index: {}]
  %s3 = inlined_call_operand.vmem [shape: s32[16,128], index: 3, kind: input, shape index: {}]
  %s4 = inlined_call_operand.vmem [shape: f32[16,128], index: 4, kind: input, shape index: {}]
  %s5 = inlined_call_operand.vmem [shape: bf16[16,128], index: 5, kind: input, shape index: {}]
  %s6 = inlined_call_operand.vmem [shape: f32[16,128], index: 6, kind: output, shape index: {}]
  %s7 = sld [smem:[#allocation0]]
  $region34: #{doge_cdmoe_forward.3} parent=0
    _
  %s9 = ssub.s32 1, %s7
  %s10 = scalar_select 0, %s9, %s7
  // Predicated region
  $region2: #{doge_cdmoe_forward.3} parent=0 // pred_check
    _
  $region3: #{doge_cdmoe_forward.3} parent=0 // pred_check_branch
    %12 = sbr.rel (0) target = $region5
  $region4: #{doge_cdmoe_forward.3} parent=0 // pred_region
    _
  $region5: #{doge_cdmoe_forward.3} parent=0 // pred_fallthru
    _
  // Predicated region
  $region6: #{doge_cdmoe_forward.3} parent=0 // pred_check
    _
  $region7: #{doge_cdmoe_forward.3} parent=0 // pred_check_branch
    %14 = sbr.rel (0) target = $region9
  $region8: #{doge_cdmoe_forward.3} parent=0 // pred_region
    _
  $region9: #{doge_cdmoe_forward.3} parent=0 // pred_fallthru
    _
  // Predicated region
  $region10: #{doge_cdmoe_forward.3} parent=0 // pred_check
    _
  $region11: #{doge_cdmoe_forward.3} parent=0 // pred_check_branch
    %16 = sbr.rel (0) target = $region13
  $region12: #{doge_cdmoe_forward.3} parent=0 // pred_region
    _
  $region13: #{doge_cdmoe_forward.3} parent=0 // pred_fallthru
    _
  // Predicated region
  $region14: #{doge_cdmoe_forward.3} parent=0 // pred_check
    _
  $region15: #{doge_cdmoe_forward.3} parent=0 // pred_check_branch
    %18 = sbr.rel (0) target = $region17
  $region16: #{doge_cdmoe_forward.3} parent=0 // pred_region
    _
  $region17: #{doge_cdmoe_forward.3} parent=0 // pred_fallthru
    _
  // Predicated region
  $region18: #{doge_cdmoe_forward.3} parent=0 // pred_check
    _
  $region19: #{doge_cdmoe_forward.3} parent=0 // pred_check_branch
    %20 = sbr.rel (0) target = $region21
  $region20: #{doge_cdmoe_forward.3} parent=0 // pred_region
    _
  $region21: #{doge_cdmoe_forward.3} parent=0 // pred_fallthru
    _
  // Predicated region
  $region22: #{doge_cdmoe_forward.3} parent=0 // pred_check
    _
  $region23: #{doge_cdmoe_forward.3} parent=0 // pred_check_branch
    %22 = sbr.rel (0) target = $region25
  $region24: #{doge_cdmoe_forward.3} parent=0 // pred_region
    _
  $region25: #{doge_cdmoe_forward.3} parent=0 // pred_fallthru
    _
  %v24 = vld [vmem:[%s0] sm:$0xf]
  %v25 = vld [vmem:[%s0 + $0x4] sm:$0xf]
  %v26 = vld [vmem:[%s1] sm:$0xf]
  %v27 = vld [vmem:[%s1 + $0x4] sm:$0xf]
  %v28 = vld [vmem:[%s1 + $0x8] sm:$0xf]
  %v29 = vld [vmem:[%s1 + $0xc] sm:$0xf]
  %v30 = vld [vmem:[%s1 + $0x10] sm:$0xf]
  %v31 = vld [vmem:[%s1 + $0x14] sm:$0xf]
  %v32 = vld [vmem:[%s1 + $0x18] sm:$0xf]
  %v33 = vld [vmem:[%s1 + $0x1c] sm:$0xf]
  %v34 = vld [vmem:[%s1 + $0x20] sm:$0xf]
  %v35 = vld [vmem:[%s1 + $0x24] sm:$0xf]
  %v36 = vld [vmem:[%s1 + $0x28] sm:$0xf]
  %v37 = vld [vmem:[%s1 + $0x2c] sm:$0xf]
  %v38 = vld [vmem:[%s1 + $0x30] sm:$0xf]
  %v39 = vld [vmem:[%s1 + $0x34] sm:$0xf]
  %v40 = vld [vmem:[%s1 + $0x38] sm:$0xf]
  %v41 = vld [vmem:[%s1 + $0x3c] sm:$0xf]
  %v44 = vunpack.c.l.b16 %v24
  %v45 = vunpack.c.l.b16 %v25
  %v46 = vpack.c.b16 %v45, %v44
  %v64 = vunpack.c.l.b16 %v26
  %v65 = vunpack.c.l.b16 %v27
  %v66 = vunpack.c.l.b16 %v28
  %v67 = vunpack.c.l.b16 %v29
  %v68 = vunpack.c.l.b16 %v30
  %v69 = vunpack.c.l.b16 %v31
  %v70 = vunpack.c.l.b16 %v32
  %v71 = vunpack.c.l.b16 %v33
  %v72 = vunpack.c.l.b16 %v34
  %v73 = vunpack.c.l.b16 %v35
  %v74 = vunpack.c.l.b16 %v36
  %v75 = vunpack.c.l.b16 %v37
  %v76 = vunpack.c.l.b16 %v38
  %v77 = vunpack.c.l.b16 %v39
  %v78 = vunpack.c.l.b16 %v40
  %v79 = vunpack.c.l.b16 %v41
  %v80 = vpack.c.b16 %v65, %v64
  %v81 = vpack.c.b16 %v67, %v66
  %v82 = vpack.c.b16 %v69, %v68
  %v83 = vpack.c.b16 %v71, %v70
  %v84 = vpack.c.b16 %v73, %v72
  %v85 = vpack.c.b16 %v75, %v74
  %v86 = vpack.c.b16 %v77, %v76
  %v87 = vpack.c.b16 %v79, %v78
  %96 = vmatprep.subr.bf16.mxu0 0
  %97 = vmatpush1.bf16.xpose.msra.mxu0 %v80
  %98 = vmatprep.subr.bf16.mxu0 0
  %99 = vmatpush1.bf16.xpose.msra.mxu0 %v81
  %100 = vmatprep.subr.bf16.mxu0 0
  %101 = vmatpush1.bf16.xpose.msra.mxu0 %v82
  %102 = vmatprep.subr.bf16.mxu0 0
  %103 = vmatpush1.bf16.xpose.msra.mxu0 %v83
  %104 = vmatprep.subr.bf16.mxu0 0
  %105 = vmatpush1.bf16.xpose.msra.mxu0 %v84
  %106 = vmatprep.subr.bf16.mxu0 0
  %107 = vmatpush1.bf16.xpose.msra.mxu0 %v85
  %108 = vmatprep.subr.bf16.mxu0 0
  %109 = vmatpush1.bf16.xpose.msra.mxu0 %v86
  %110 = vmatprep.subr.bf16.mxu0 0
  %111 = vmatpush1.bf16.xpose.msra.mxu0 %v87
  %112 = vmatprep.subr.bf16.mxu0 0
  %113 = vmatpush1.bf16.xpose.msra.mxu0 0
  %114 = vmatprep.subr.bf16.mxu0 0
  %115 = vmatpush1.bf16.xpose.msra.mxu0 0
  %116 = vmatprep.subr.bf16.mxu0 0
  %117 = vmatpush1.bf16.xpose.msra.mxu0 0
  %118 = vmatprep.subr.bf16.mxu0 0
  %119 = vmatpush1.bf16.xpose.msra.mxu0 0
  %120 = vmatprep.subr.bf16.mxu0 0
  %121 = vmatpush1.bf16.xpose.msra.mxu0 0
  %122 = vmatprep.subr.bf16.mxu0 0
  %123 = vmatpush1.bf16.xpose.msra.mxu0 0
  %124 = vmatprep.subr.bf16.mxu0 0
  %125 = vmatpush1.bf16.xpose.msra.mxu0 0
  %126 = vmatprep.subr.bf16.mxu0 0
  %127 = vmatpush1.bf16.xpose.msra.mxu0 0
  %128 = vmatprep.mubr.bf16.mxu0 0
  %129 = vmatmul.mubr.bf16.gmra.mrb[0].mxu0 %v46
  %v130 = vpop.f32.mrb[0].mxu0
  %v131 = vadd.f32 0.0, %v130
  %v132 = vpop.f32.mrb[0].mxu0
  %v133 = vpop.f32.mrb[0].mxu0
  %v134 = vadd.f32 0.0, %v133
  %v135 = vpop.f32.mrb[0].mxu0
  %136 = vdwg.mxu0
  %v137 = vxor.u32 %v131, 2147483648
  %v138 = vxor.u32 %v134, 2147483648
  %v139 = vmul.f32 %v137, 1.442695
  %v140 = vpow.pop %v139
  %v141 = vmul.f32 %v138, 1.442695
  %v142 = vpow.pop %v141
  %v143 = vadd.f32 %v140, 1.0
  %v144 = vadd.f32 %v142, 1.0
  %v145 = vrcp.pop %v143
  %v146 = vmul.f32 1.0, %v145
  %v147 = vrcp.pop %v144
  %v148 = vmul.f32 1.0, %v147
  %v149 = vmul.f32 %v131, %v146
  %v150 = vmul.f32 %v134, %v148
  %v151 = vld [vmem:[%s3] sm:$0xff]
  %v152 = vld [vmem:[%s3 + $0x8] sm:$0xff]
  %v153 = vld [vmem:[%s4] sm:$0xff]
  %v154 = vld [vmem:[%s4 + $0x8] sm:$0xff]
  %v155 = vlaneseq
  %v156 = vand.u32 %v155, 127
  %157 = vset.pattern.permute.xlu0 0
  %158 = vperm.xlu0 %157, %v151
  %v159 = vpop.permute.xlu0 %158
  %160 = vset.pattern.permute.xlu0 0
  %161 = vperm.xlu0 %160, %v152
  %v162 = vpop.permute.xlu0 %161
  %vm163 = vcmp.eq.s32.totalorder %v156, %v159
  %vm164 = vcmp.eq.s32.totalorder %v156, %v162
  %166 = vset.pattern.permute.xlu0 0
  %167 = vperm.xlu0 %166, %v153
  %v168 = vpop.permute.xlu0 %167
  %171 = vset.pattern.permute.xlu0 0
  %172 = vperm.xlu0 %171, %v154
  %v173 = vpop.permute.xlu0 %172
  %v175 = vsel %vm163, %v168, 0.0
  %v176 = vsel %vm164, %v173, 0.0
  %v177 = vadd.f32 %v175, 0.0
  %v178 = vadd.f32 %v176, 0.0
  %179 = vset.pattern.permute.xlu0 1
  %180 = vperm.xlu0 %179, %v151
  %v181 = vpop.permute.xlu0 %180
  %182 = vset.pattern.permute.xlu0 1
  %183 = vperm.xlu0 %182, %v152
  %v184 = vpop.permute.xlu0 %183
  %vm185 = vcmp.eq.s32.totalorder %v156, %v181
  %vm186 = vcmp.eq.s32.totalorder %v156, %v184
  %187 = vset.pattern.permute.xlu0 1
  %188 = vperm.xlu0 %187, %v153
  %v189 = vpop.permute.xlu0 %188
  %191 = vset.pattern.permute.xlu0 1
  %192 = vperm.xlu0 %191, %v154
  %v193 = vpop.permute.xlu0 %192
  %v195 = vsel %vm185, %v189, 0.0
  %v196 = vsel %vm186, %v193, 0.0
  %v197 = vadd.f32 %v177, %v195
  %v198 = vadd.f32 %v178, %v196
  %199 = vset.pattern.permute.xlu0 2
  %200 = vperm.xlu0 %199, %v151
  %v201 = vpop.permute.xlu0 %200
  %202 = vset.pattern.permute.xlu0 2
  %203 = vperm.xlu0 %202, %v152
  %v204 = vpop.permute.xlu0 %203
  %vm205 = vcmp.eq.s32.totalorder %v156, %v201
  %vm206 = vcmp.eq.s32.totalorder %v156, %v204
  %207 = vset.pattern.permute.xlu0 2
  %208 = vperm.xlu0 %207, %v153
  %v209 = vpop.permute.xlu0 %208
  %211 = vset.pattern.permute.xlu0 2
  %212 = vperm.xlu0 %211, %v154
  %v213 = vpop.permute.xlu0 %212
  %v215 = vsel %vm205, %v209, 0.0
  %v216 = vsel %vm206, %v213, 0.0
  %v217 = vadd.f32 %v197, %v215
  %v218 = vadd.f32 %v198, %v216
  %219 = vset.pattern.permute.xlu0 3
  %220 = vperm.xlu0 %219, %v151
  %v221 = vpop.permute.xlu0 %220
  %222 = vset.pattern.permute.xlu0 3
  %223 = vperm.xlu0 %222, %v152
  %v224 = vpop.permute.xlu0 %223
  %vm225 = vcmp.eq.s32.totalorder %v156, %v221
  %vm226 = vcmp.eq.s32.totalorder %v156, %v224
  %227 = vset.pattern.permute.xlu0 3
  %228 = vperm.xlu0 %227, %v153
  %v229 = vpop.permute.xlu0 %228
  %231 = vset.pattern.permute.xlu0 3
  %232 = vperm.xlu0 %231, %v154
  %v233 = vpop.permute.xlu0 %232
  %v235 = vsel %vm225, %v229, 0.0
  %v236 = vsel %vm226, %v233, 0.0
  %v237 = vadd.f32 %v217, %v235
  %v238 = vadd.f32 %v218, %v236
  %v239 = vmul.f32 %v149, %v237
  %v240 = vmul.f32 %v150, %v238
  %v241 = vld [vmem:[%s2] sm:$0xf]
  %v242 = vld [vmem:[%s2 + $0x4] sm:$0xf]
  %v243 = vld [vmem:[%s2 + $0x8] sm:$0xf]
  %v244 = vld [vmem:[%s2 + $0xc] sm:$0xf]
  %v245 = vld [vmem:[%s2 + $0x10] sm:$0xf]
  %v246 = vld [vmem:[%s2 + $0x14] sm:$0xf]
  %v247 = vld [vmem:[%s2 + $0x18] sm:$0xf]
  %v248 = vld [vmem:[%s2 + $0x1c] sm:$0xf]
  %v249 = vld [vmem:[%s2 + $0x20] sm:$0xf]
  %v250 = vld [vmem:[%s2 + $0x24] sm:$0xf]
  %v251 = vld [vmem:[%s2 + $0x28] sm:$0xf]
  %v252 = vld [vmem:[%s2 + $0x2c] sm:$0xf]
  %v253 = vld [vmem:[%s2 + $0x30] sm:$0xf]
  %v254 = vld [vmem:[%s2 + $0x34] sm:$0xf]
  %v255 = vld [vmem:[%s2 + $0x38] sm:$0xf]
  %v256 = vld [vmem:[%s2 + $0x3c] sm:$0xf]
  %v257 = vunpack.c.l.bf16 %v241
  %v258 = vunpack.c.l.bf16 %v242
  %v259 = vunpack.c.l.bf16 %v243
  %v260 = vunpack.c.l.bf16 %v244
  %v261 = vunpack.c.l.bf16 %v245
  %v262 = vunpack.c.l.bf16 %v246
  %v263 = vunpack.c.l.bf16 %v247
  %v264 = vunpack.c.l.bf16 %v248
  %v265 = vunpack.c.l.bf16 %v249
  %v266 = vunpack.c.l.bf16 %v250
  %v267 = vunpack.c.l.bf16 %v251
  %v268 = vunpack.c.l.bf16 %v252
  %v269 = vunpack.c.l.bf16 %v253
  %v270 = vunpack.c.l.bf16 %v254
  %v271 = vunpack.c.l.bf16 %v255
  %v272 = vunpack.c.l.bf16 %v256
  %273 = vmatprep.subr.mxu0 0.0
  %274 = vmatpush1.msra.mxu0 %v257
  %275 = vmatprep.subr.mxu0 0.0
  %276 = vmatpush1.msra.mxu0 %v258
  %277 = vmatprep.subr.mxu0 0.0
  %278 = vmatpush1.msra.mxu0 %v259
  %279 = vmatprep.subr.mxu0 0.0
  %280 = vmatpush1.msra.mxu0 %v260
  %281 = vmatprep.subr.mxu0 0.0
  %282 = vmatpush1.msra.mxu0 %v261
  %283 = vmatprep.subr.mxu0 0.0
  %284 = vmatpush1.msra.mxu0 %v262
  %285 = vmatprep.subr.mxu0 0.0
  %286 = vmatpush1.msra.mxu0 %v263
  %287 = vmatprep.subr.mxu0 0.0
  %288 = vmatpush1.msra.mxu0 %v264
  %289 = vmatprep.subr.mxu0 0.0
  %290 = vmatpush1.msra.mxu0 %v265
  %291 = vmatprep.subr.mxu0 0.0
  %292 = vmatpush1.msra.mxu0 %v266
  %293 = vmatprep.subr.mxu0 0.0
  %294 = vmatpush1.msra.mxu0 %v267
  %295 = vmatprep.subr.mxu0 0.0
  %296 = vmatpush1.msra.mxu0 %v268
  %297 = vmatprep.subr.mxu0 0.0
  %298 = vmatpush1.msra.mxu0 %v269
  %299 = vmatprep.subr.mxu0 0.0
  %300 = vmatpush1.msra.mxu0 %v270
  %301 = vmatprep.subr.mxu0 0.0
  %302 = vmatpush1.msra.mxu0 %v271
  %303 = vmatprep.subr.mxu0 0.0
  %304 = vmatpush1.msra.mxu0 %v272
  %305 = vmatprep.subr.mxu0 0.0
  %306 = vmatpush1.msra.mxu0 0.0
  %307 = vmatprep.subr.mxu0 0.0
  %308 = vmatpush1.msra.mxu0 0.0
  %309 = vmatprep.subr.mxu0 0.0
  %310 = vmatpush1.msra.mxu0 0.0
  %311 = vmatprep.subr.mxu0 0.0
  %312 = vmatpush1.msra.mxu0 0.0
  %313 = vmatprep.subr.mxu0 0.0
  %314 = vmatpush1.msra.mxu0 0.0
  %315 = vmatprep.subr.mxu0 0.0
  %316 = vmatpush1.msra.mxu0 0.0
  %317 = vmatprep.subr.mxu0 0.0
  %318 = vmatpush1.msra.mxu0 0.0
  %319 = vmatprep.subr.mxu0 0.0
  %320 = vmatpush1.msra.mxu0 0.0
  %321 = vmatprep.subr.mxu0 0.0
  %322 = vmatpush1.msra.mxu0 0.0
  %323 = vmatprep.subr.mxu0 0.0
  %324 = vmatpush1.msra.mxu0 0.0
  %325 = vmatprep.subr.mxu0 0.0
  %326 = vmatpush1.msra.mxu0 0.0
  %327 = vmatprep.subr.mxu0 0.0
  %328 = vmatpush1.msra.mxu0 0.0
  %329 = vmatprep.subr.mxu0 0.0
  %330 = vmatpush1.msra.mxu0 0.0
  %331 = vmatprep.subr.mxu0 0.0
  %332 = vmatpush1.msra.mxu0 0.0
  %333 = vmatprep.subr.mxu0 0.0
  %334 = vmatpush1.msra.mxu0 0.0
  %335 = vmatprep.subr.mxu0 0.0
  %336 = vmatpush1.msra.mxu0 0.0
  %337 = vmatprep.mubr.f32.mxu0 0.0
  %338 = vmatmul.mubr.f32.gmra.mrb[0].mxu0 %v239
  %v339 = vpop.f32.mrb[0].mxu0
  %v340 = vadd.f32 0.0, %v339
  %v341 = vpop.f32.mrb[0].mxu0
  %342 = vmatprep.mubr.f32.mxu0 0.0
  %343 = vmatmul.mubr.f32.gmra.mrb[0].mxu0 %v240
  %v344 = vpop.f32.mrb[0].mxu0
  %v345 = vadd.f32 0.0, %v344
  %v346 = vpop.f32.mrb[0].mxu0
  %347 = vdwg.mxu0
  %v348 = vld [vmem:[%s5] sm:$0xf]
  %v349 = vld [vmem:[%s5 + $0x4] sm:$0xf]
  %v350 = vunpack.c.l.bf16 %v348
  %v351 = vunpack.c.l.bf16 %v349
  %v352 = vadd.f32 %v350, %v340
  %v353 = vadd.f32 %v351, %v345
  %354 = vst [vmem:[%s6] sm:$0xff] %v352
  %355 = vst [vmem:[%s6 + $0x8] sm:$0xff] %v353
  // Predicated region
  $region26: #{doge_cdmoe_forward.3} parent=0 // pred_check
    _
  $region27: #{doge_cdmoe_forward.3} parent=0 // pred_check_branch
    %357 = sbr.rel (0) target = $region29
  $region28: #{doge_cdmoe_forward.3} parent=0 // pred_region
    _
  $region29: #{doge_cdmoe_forward.3} parent=0 // pred_fallthru
    _
  // Predicated region
  $region30: #{doge_cdmoe_forward.3} parent=0 // pred_check
    _
  $region31: #{doge_cdmoe_forward.3} parent=0 // pred_check_branch
    %359 = sbr.rel (0) target = $region33
  $region32: #{doge_cdmoe_forward.3} parent=0 // pred_region
    _
  $region33: #{doge_cdmoe_forward.3} parent=0 // pred_fallthru
    _

// kernel: doge_cdmoe_forward.2
$region0: #{doge_cdmoe_forward.2}
  #allocation0 [shape = 'u32[]', space=smem, size = 0x4, offset = 0x4, fixed_abs, tag = 'smem constant byte address 0x4 - core index']
  #allocation1 [shape = 'u32[144,128]{1,0:T(1,128)}', space=vmem, size = 0x12000, scoped, tag = 'internal scratch']
  %s0 = inlined_call_operand.vmem [shape: bf16[16,128], index: 0, kind: input, shape index: {}]
  %s1 = inlined_call_operand.hbm [shape: bf16[128,384], index: 1, kind: input, shape index: {}]
  %s2 = inlined_call_operand.hbm [shape: bf16[128,128], index: 2, kind: input, shape index: {}]
  %s3 = inlined_call_operand.vmem [shape: bf16[16,128], index: 3, kind: output, shape index: {0}]
  %s4 = inlined_call_operand.vmem [shape: bf16[16,128], index: 4, kind: output, shape index: {1}]
  %5 = xla_tuple %s3, %s4
  %s6 = sld [smem:[#allocation0]]
  $region38: #{doge_cdmoe_forward.2} parent=0
    _
  %s8 = ssub.s32 1, %s6
  %s9 = scalar_select 0, %s8, %s6
  $region1: #{doge_cdmoe_forward.2} parent=0
    #allocation2 [shape = 'u8[98304]{0}', space=vmem, size = 0x18000, scoped, tag = 'input window, operand 1, single buffered']
    #allocation3 [shape = 's32[1]{0}', space=sflag, size = 0x4, scoped, tag = 'scoped memory for doge_cdmoe_forward.2']
    #allocation4 [shape = 'u8[32768]{0}', space=vmem, size = 0x8000, scoped, tag = 'input window, operand 2, single buffered']
    #allocation5 [shape = 's32[1]{0}', space=sflag, size = 0x4, scoped, tag = 'scoped memory for doge_cdmoe_forward.2']
    %10 = vsyncpa [#allocation3], 0
    %11 = vsyncpa [#allocation5], 0
    // Predicated region
    $region2: #{doge_cdmoe_forward.2} parent=1 // pred_check
      _
    $region3: #{doge_cdmoe_forward.2} parent=1 // pred_check_branch
      %13 = sbr.rel (0) target = $region5
    $region4: #{doge_cdmoe_forward.2} parent=1 // pred_region
      _
    $region5: #{doge_cdmoe_forward.2} parent=1 // pred_fallthru
      _
    // Predicated region
    $region6: #{doge_cdmoe_forward.2} parent=1 // pred_check
      _
    $region7: #{doge_cdmoe_forward.2} parent=1 // pred_check_branch
      %15 = sbr.rel (0) target = $region9
    $region8: #{doge_cdmoe_forward.2} parent=1 // pred_region
      %s17 = ssub.s32 3072, 3072
      %18 = vsyncadd [#allocation3], %s17
      %s19 = sshll.u32 [#allocation2], 4
      %s20 = int_to_ptr.vmem [resolvable:$true] %s19
      %25 = dma.hbm_to_vmem [thread:$0]  %s1, 3072, %s20, [#allocation3], 192, 192, 12
    $region9: #{doge_cdmoe_forward.2} parent=1 // pred_fallthru
      _
    // Predicated region
    $region10: #{doge_cdmoe_forward.2} parent=1 // pred_check
      _
    $region11: #{doge_cdmoe_forward.2} parent=1 // pred_check_branch
      %27 = sbr.rel (0) target = $region13
    $region12: #{doge_cdmoe_forward.2} parent=1 // pred_region
      %s29 = ssub.s32 1024, 1024
      %30 = vsyncadd [#allocation5], %s29
      %s31 = sshll.u32 [#allocation4], 4
      %s32 = int_to_ptr.vmem [resolvable:$true] %s31
      %37 = dma.hbm_to_vmem [thread:$0]  %s2, 1024, %s32, [#allocation5], 64, 64, 4
    $region13: #{doge_cdmoe_forward.2} parent=1 // pred_fallthru
      _
    // Predicated region
    $region14: #{doge_cdmoe_forward.2} parent=1 // pred_check
      _
    $region15: #{doge_cdmoe_forward.2} parent=1 // pred_check_branch
      %39 = sbr.rel (0) target = $region17
    $region16: #{doge_cdmoe_forward.2} parent=1 // pred_region
      %40 = dma.done [#allocation3], 3072
    $region17: #{doge_cdmoe_forward.2} parent=1 // pred_fallthru
      _
    // Predicated region
    $region18: #{doge_cdmoe_forward.2} parent=1 // pred_check
      _
    $region19: #{doge_cdmoe_forward.2} parent=1 // pred_check_branch
      %42 = sbr.rel (0) target = $region21
    $region20: #{doge_cdmoe_forward.2} parent=1 // pred_region
      %43 = dma.done [#allocation5], 1024
    $region21: #{doge_cdmoe_forward.2} parent=1 // pred_fallthru
      _
    %v45 = vld [vmem:[%s0] sm:$0xf]
    %v46 = vld [vmem:[%s0 + $0x4] sm:$0xf]
    %v47 = vld [vmem:[#allocation2] sm:$0xff]
    %v48 = vld [vmem:[#allocation2 + $0x8] sm:$0xf]
    %v49 = vld [vmem:[#allocation2 + $0xc] sm:$0xff]
    %v50 = vld [vmem:[#allocation2 + $0x14] sm:$0xf]
    %v51 = vld [vmem:[#allocation2 + $0x18] sm:$0xff]
    %v52 = vld [vmem:[#allocation2 + $0x20] sm:$0xf]
    %v53 = vld [vmem:[#allocation2 + $0x24] sm:$0xff]
    %v54 = vld [vmem:[#allocation2 + $0x2c] sm:$0xf]
    %v55 = vld [vmem:[#allocation2 + $0x30] sm:$0xff]
    %v56 = vld [vmem:[#allocation2 + $0x38] sm:$0xf]
    %v57 = vld [vmem:[#allocation2 + $0x3c] sm:$0xff]
    %v58 = vld [vmem:[#allocation2 + $0x44] sm:$0xf]
    %v59 = vld [vmem:[#allocation2 + $0x48] sm:$0xff]
    %v60 = vld [vmem:[#allocation2 + $0x50] sm:$0xf]
    %v61 = vld [vmem:[#allocation2 + $0x54] sm:$0xff]
    %v62 = vld [vmem:[#allocation2 + $0x5c] sm:$0xf]
    %v63 = vld [vmem:[#allocation2 + $0x60] sm:$0xff]
    %v64 = vld [vmem:[#allocation2 + $0x68] sm:$0xf]
    %v65 = vld [vmem:[#allocation2 + $0x6c] sm:$0xff]
    %v66 = vld [vmem:[#allocation2 + $0x74] sm:$0xf]
    %v67 = vld [vmem:[#allocation2 + $0x78] sm:$0xff]
    %v68 = vld [vmem:[#allocation2 + $0x80] sm:$0xf]
    %v69 = vld [vmem:[#allocation2 + $0x84] sm:$0xff]
    %v70 = vld [vmem:[#allocation2 + $0x8c] sm:$0xf]
    %v71 = vld [vmem:[#allocation2 + $0x90] sm:$0xff]
    %v72 = vld [vmem:[#allocation2 + $0x98] sm:$0xf]
    %v73 = vld [vmem:[#allocation2 + $0x9c] sm:$0xff]
    %v74 = vld [vmem:[#allocation2 + $0xa4] sm:$0xf]
    %v75 = vld [vmem:[#allocation2 + $0xa8] sm:$0xff]
    %v76 = vld [vmem:[#allocation2 + $0xb0] sm:$0xf]
    %v77 = vld [vmem:[#allocation2 + $0xb4] sm:$0xff]
    %v78 = vld [vmem:[#allocation2 + $0xbc] sm:$0xf]
    %v81 = vunpack.c.l.b16 %v45
    %v82 = vunpack.c.l.b16 %v46
    %v83 = vpack.c.b16 %v82, %v81
    %v117 = vunpack.c.l.b16 %v47
    %v118 = vunpack.c.h.b16 %v47
    %v119 = vunpack.c.l.b16 %v48
    %v120 = vunpack.c.l.b16 %v49
    %v121 = vunpack.c.h.b16 %v49
    %v122 = vunpack.c.l.b16 %v50
    %v123 = vunpack.c.l.b16 %v51
    %v124 = vunpack.c.h.b16 %v51
    %v125 = vunpack.c.l.b16 %v52
    %v126 = vunpack.c.l.b16 %v53
    %v127 = vunpack.c.h.b16 %v53
    %v128 = vunpack.c.l.b16 %v54
    %v129 = vunpack.c.l.b16 %v55
    %v130 = vunpack.c.h.b16 %v55
    %v131 = vunpack.c.l.b16 %v56
    %v132 = vunpack.c.l.b16 %v57
    %v133 = vunpack.c.h.b16 %v57
    %v134 = vunpack.c.l.b16 %v58
    %v135 = vunpack.c.l.b16 %v59
    %v136 = vunpack.c.h.b16 %v59
    %v137 = vunpack.c.l.b16 %v60
    %v138 = vunpack.c.l.b16 %v61
    %v139 = vunpack.c.h.b16 %v61
    %v140 = vunpack.c.l.b16 %v62
    %v141 = vunpack.c.l.b16 %v63
    %v142 = vunpack.c.h.b16 %v63
    %v143 = vunpack.c.l.b16 %v64
    %v144 = vunpack.c.l.b16 %v65
    %v145 = vunpack.c.h.b16 %v65
    %v146 = vunpack.c.l.b16 %v66
    %v147 = vunpack.c.l.b16 %v67
    %v148 = vunpack.c.h.b16 %v67
    %v149 = vunpack.c.l.b16 %v68
    %v150 = vunpack.c.l.b16 %v69
    %v151 = vunpack.c.h.b16 %v69
    %v152 = vunpack.c.l.b16 %v70
    %v153 = vunpack.c.l.b16 %v71
    %v154 = vunpack.c.h.b16 %v71
    %v155 = vunpack.c.l.b16 %v72
    %v156 = vunpack.c.l.b16 %v73
    %v157 = vunpack.c.h.b16 %v73
    %v158 = vunpack.c.l.b16 %v74
    %v159 = vunpack.c.l.b16 %v75
    %v160 = vunpack.c.h.b16 %v75
    %v161 = vunpack.c.l.b16 %v76
    %v162 = vunpack.c.l.b16 %v77
    %v163 = vunpack.c.h.b16 %v77
    %v164 = vunpack.c.l.b16 %v78
    %v165 = vpack.c.b16 %v120, %v117
    %v166 = vpack.c.b16 %v121, %v118
    %v167 = vpack.c.b16 %v122, %v119
    %v168 = vpack.c.b16 %v126, %v123
    %v169 = vpack.c.b16 %v127, %v124
    %v170 = vpack.c.b16 %v128, %v125
    %v171 = vpack.c.b16 %v132, %v129
    %v172 = vpack.c.b16 %v133, %v130
    %v173 = vpack.c.b16 %v134, %v131
    %v174 = vpack.c.b16 %v138, %v135
    %v175 = vpack.c.b16 %v139, %v136
    %v176 = vpack.c.b16 %v140, %v137
    %v177 = vpack.c.b16 %v144, %v141
    %v178 = vpack.c.b16 %v145, %v142
    %v179 = vpack.c.b16 %v146, %v143
    %v180 = vpack.c.b16 %v150, %v147
    %v181 = vpack.c.b16 %v151, %v148
    %v182 = vpack.c.b16 %v152, %v149
    %v183 = vpack.c.b16 %v156, %v153
    %v184 = vpack.c.b16 %v157, %v154
    %v185 = vpack.c.b16 %v158, %v155
    %v186 = vpack.c.b16 %v162, %v159
    %v187 = vpack.c.b16 %v163, %v160
    %v188 = vpack.c.b16 %v164, %v161
    %213 = vmatprep.subr.bf16.mxu0 %v166
    %214 = vmatpush1.bf16.msra.mxu0 %v165
    %215 = vmatprep.subr.bf16.mxu0 %v169
    %216 = vmatpush1.bf16.msra.mxu0 %v168
    %217 = vmatprep.subr.bf16.mxu0 %v172
    %218 = vmatpush1.bf16.msra.mxu0 %v171
    %219 = vmatprep.subr.bf16.mxu0 %v175
    %220 = vmatpush1.bf16.msra.mxu0 %v174
    %221 = vmatprep.subr.bf16.mxu0 %v178
    %222 = vmatpush1.bf16.msra.mxu0 %v177
    %223 = vmatprep.subr.bf16.mxu0 %v181
    %224 = vmatpush1.bf16.msra.mxu0 %v180
    %225 = vmatprep.subr.bf16.mxu0 %v184
    %226 = vmatpush1.bf16.msra.mxu0 %v183
    %227 = vmatprep.subr.bf16.mxu0 %v187
    %228 = vmatpush1.bf16.msra.mxu0 %v186
    %229 = vmatprep.subr.bf16.mxu0 0
    %230 = vmatpush1.bf16.msra.mxu0 0
    %231 = vmatprep.subr.bf16.mxu0 0
    %232 = vmatpush1.bf16.msra.mxu0 0
    %233 = vmatprep.subr.bf16.mxu0 0
    %234 = vmatpush1.bf16.msra.mxu0 0
    %235 = vmatprep.subr.bf16.mxu0 0
    %236 = vmatpush1.bf16.msra.mxu0 0
    %237 = vmatprep.subr.bf16.mxu0 0
    %238 = vmatpush1.bf16.msra.mxu0 0
    %239 = vmatprep.subr.bf16.mxu0 0
    %240 = vmatpush1.bf16.msra.mxu0 0
    %241 = vmatprep.subr.bf16.mxu0 0
    %242 = vmatpush1.bf16.msra.mxu0 0
    %243 = vmatprep.subr.bf16.mxu0 0
    %244 = vmatpush1.bf16.msra.mxu0 0
    %245 = vmatprep.mubr.bf16.mxu0 0
    %246 = vmatmul.mubr.bf16.gmra.mrb[0].mxu0 %v83
    %v247 = vpop.f32.mrb[0].mxu0
    %v248 = vadd.f32 0.0, %v247
    %v249 = vpop.f32.mrb[0].mxu0
    %v250 = vadd.f32 0.0, %v249
    %v251 = vpop.f32.mrb[0].mxu0
    %v252 = vadd.f32 0.0, %v251
    %v253 = vpop.f32.mrb[0].mxu0
    %v254 = vadd.f32 0.0, %v253
    %255 = vdwg.mxu0
    %256 = vmatprep.subr.bf16.mxu0 0
    %257 = vmatpush1.bf16.msra.mxu0 %v167
    %258 = vmatprep.subr.bf16.mxu0 0
    %259 = vmatpush1.bf16.msra.mxu0 %v170
    %260 = vmatprep.subr.bf16.mxu0 0
    %261 = vmatpush1.bf16.msra.mxu0 %v173
    %262 = vmatprep.subr.bf16.mxu0 0
    %263 = vmatpush1.bf16.msra.mxu0 %v176
    %264 = vmatprep.subr.bf16.mxu0 0
    %265 = vmatpush1.bf16.msra.mxu0 %v179
    %266 = vmatprep.subr.bf16.mxu0 0
    %267 = vmatpush1.bf16.msra.mxu0 %v182
    %268 = vmatprep.subr.bf16.mxu0 0
    %269 = vmatpush1.bf16.msra.mxu0 %v185
    %270 = vmatprep.subr.bf16.mxu0 0
    %271 = vmatpush1.bf16.msra.mxu0 %v188
    %272 = vmatprep.subr.bf16.mxu0 0
    %273 = vmatpush1.bf16.msra.mxu0 0
    %274 = vmatprep.subr.bf16.mxu0 0
    %275 = vmatpush1.bf16.msra.mxu0 0
    %276 = vmatprep.subr.bf16.mxu0 0
    %277 = vmatpush1.bf16.msra.mxu0 0
    %278 = vmatprep.subr.bf16.mxu0 0
    %279 = vmatpush1.bf16.msra.mxu0 0
    %280 = vmatprep.subr.bf16.mxu0 0
    %281 = vmatpush1.bf16.msra.mxu0 0
    %282 = vmatprep.subr.bf16.mxu0 0
    %283 = vmatpush1.bf16.msra.mxu0 0
    %284 = vmatprep.subr.bf16.mxu0 0
    %285 = vmatpush1.bf16.msra.mxu0 0
    %286 = vmatprep.subr.bf16.mxu0 0
    %287 = vmatpush1.bf16.msra.mxu0 0
    %288 = vmatprep.mubr.bf16.mxu0 0
    %289 = vmatmul.mubr.bf16.gmra.mrb[0].mxu0 %v83
    %v290 = vpop.f32.mrb[0].mxu0
    %v291 = vadd.f32 0.0, %v290
    %v292 = vpop.f32.mrb[0].mxu0
    %v293 = vpop.f32.mrb[0].mxu0
    %v294 = vadd.f32 0.0, %v293
    %v295 = vpop.f32.mrb[0].mxu0
    %296 = vdwg.mxu0
    %v297 = vxor.u32 %v248, 2147483648
    %v298 = vxor.u32 %v252, 2147483648
    %v299 = vmul.f32 %v297, 1.442695
    %v300 = vpow.pop %v299
    %v301 = vmul.f32 %v298, 1.442695
    %v302 = vpow.pop %v301
    %v303 = vadd.f32 %v300, 1.0
    %v304 = vadd.f32 %v302, 1.0
    %v305 = vrcp.pop %v303
    %v306 = vmul.f32 1.0, %v305
    %v307 = vrcp.pop %v304
    %v308 = vmul.f32 1.0, %v307
    %v309 = vmul.f32 %v248, %v306
    %v310 = vmul.f32 %v252, %v308
    %v311 = vmul.f32 %v309, %v250
    %v312 = vmul.f32 %v310, %v254
    %v313 = vpack.c.bf16 %v312, %v311
    %v314 = vld [vmem:[#allocation4] sm:$0xf]
    %v315 = vld [vmem:[#allocation4 + $0x4] sm:$0xf]
    %v316 = vld [vmem:[#allocation4 + $0x8] sm:$0xf]
    %v317 = vld [vmem:[#allocation4 + $0xc] sm:$0xf]
    %v318 = vld [vmem:[#allocation4 + $0x10] sm:$0xf]
    %v319 = vld [vmem:[#allocation4 + $0x14] sm:$0xf]
    %v320 = vld [vmem:[#allocation4 + $0x18] sm:$0xf]
    %v321 = vld [vmem:[#allocation4 + $0x1c] sm:$0xf]
    %v322 = vld [vmem:[#allocation4 + $0x20] sm:$0xf]
    %v323 = vld [vmem:[#allocation4 + $0x24] sm:$0xf]
    %v324 = vld [vmem:[#allocation4 + $0x28] sm:$0xf]
    %v325 = vld [vmem:[#allocation4 + $0x2c] sm:$0xf]
    %v326 = vld [vmem:[#allocation4 + $0x30] sm:$0xf]
    %v327 = vld [vmem:[#allocation4 + $0x34] sm:$0xf]
    %v328 = vld [vmem:[#allocation4 + $0x38] sm:$0xf]
    %v329 = vld [vmem:[#allocation4 + $0x3c] sm:$0xf]
    %v346 = vunpack.c.l.b16 %v314
    %v347 = vunpack.c.l.b16 %v315
    %v348 = vunpack.c.l.b16 %v316
    %v349 = vunpack.c.l.b16 %v317
    %v350 = vunpack.c.l.b16 %v318
    %v351 = vunpack.c.l.b16 %v319
    %v352 = vunpack.c.l.b16 %v320
    %v353 = vunpack.c.l.b16 %v321
    %v354 = vunpack.c.l.b16 %v322
    %v355 = vunpack.c.l.b16 %v323
    %v356 = vunpack.c.l.b16 %v324
    %v357 = vunpack.c.l.b16 %v325
    %v358 = vunpack.c.l.b16 %v326
    %v359 = vunpack.c.l.b16 %v327
    %v360 = vunpack.c.l.b16 %v328
    %v361 = vunpack.c.l.b16 %v329
    %v362 = vpack.c.b16 %v347, %v346
    %v363 = vpack.c.b16 %v349, %v348
    %v364 = vpack.c.b16 %v351, %v350
    %v365 = vpack.c.b16 %v353, %v352
    %v366 = vpack.c.b16 %v355, %v354
    %v367 = vpack.c.b16 %v357, %v356
    %v368 = vpack.c.b16 %v359, %v358
    %v369 = vpack.c.b16 %v361, %v360
    %378 = vmatprep.subr.bf16.mxu0 0
    %379 = vmatpush1.bf16.msra.mxu0 %v362
    %380 = vmatprep.subr.bf16.mxu0 0
    %381 = vmatpush1.bf16.msra.mxu0 %v363
    %382 = vmatprep.subr.bf16.mxu0 0
    %383 = vmatpush1.bf16.msra.mxu0 %v364
    %384 = vmatprep.subr.bf16.mxu0 0
    %385 = vmatpush1.bf16.msra.mxu0 %v365
    %386 = vmatprep.subr.bf16.mxu0 0
    %387 = vmatpush1.bf16.msra.mxu0 %v366
    %388 = vmatprep.subr.bf16.mxu0 0
    %389 = vmatpush1.bf16.msra.mxu0 %v367
    %390 = vmatprep.subr.bf16.mxu0 0
    %391 = vmatpush1.bf16.msra.mxu0 %v368
    %392 = vmatprep.subr.bf16.mxu0 0
    %393 = vmatpush1.bf16.msra.mxu0 %v369
    %394 = vmatprep.subr.bf16.mxu0 0
    %395 = vmatpush1.bf16.msra.mxu0 0
    %396 = vmatprep.subr.bf16.mxu0 0
    %397 = vmatpush1.bf16.msra.mxu0 0
    %398 = vmatprep.subr.bf16.mxu0 0
    %399 = vmatpush1.bf16.msra.mxu0 0
    %400 = vmatprep.subr.bf16.mxu0 0
    %401 = vmatpush1.bf16.msra.mxu0 0
    %402 = vmatprep.subr.bf16.mxu0 0
    %403 = vmatpush1.bf16.msra.mxu0 0
    %404 = vmatprep.subr.bf16.mxu0 0
    %405 = vmatpush1.bf16.msra.mxu0 0
    %406 = vmatprep.subr.bf16.mxu0 0
    %407 = vmatpush1.bf16.msra.mxu0 0
    %408 = vmatprep.subr.bf16.mxu0 0
    %409 = vmatpush1.bf16.msra.mxu0 0
    %410 = vmatprep.mubr.bf16.mxu0 0
    %411 = vmatmul.mubr.bf16.gmra.mrb[0].mxu0 %v313
    %v412 = vpop.f32.mrb[0].mxu0
    %v413 = vadd.f32 0.0, %v412
    %v414 = vpop.f32.mrb[0].mxu0
    %v415 = vpop.f32.mrb[0].mxu0
    %v416 = vadd.f32 0.0, %v415
    %v417 = vpop.f32.mrb[0].mxu0
    %418 = vdwg.mxu0
    %v419 = vpack.c.bf16 %v416, %v413
    %v421 = vunpack.c.l.b16 %v419
    %v422 = vunpack.c.h.b16 %v419
    %v423 = vpack.c.b16 %v421, %v421
    %v424 = vpack.c.b16 %v422, %v422
    %427 = vst [vmem:[%s3] sm:$0xf] %v423
    %428 = vst [vmem:[%s3 + $0x4] sm:$0xf] %v424
    %v429 = vpack.c.bf16 %v294, %v291
    %v431 = vunpack.c.l.b16 %v429
    %v432 = vunpack.c.h.b16 %v429
    %v433 = vpack.c.b16 %v431, %v431
    %v434 = vpack.c.b16 %v432, %v432
    %437 = vst [vmem:[%s4] sm:$0xf] %v433
    %438 = vst [vmem:[%s4 + $0x4] sm:$0xf] %v434
    // Predicated region
    $region22: #{doge_cdmoe_forward.2} parent=1 // pred_check
      _
    $region23: #{doge_cdmoe_forward.2} parent=1 // pred_check_branch
      %440 = sbr.rel (0) target = $region25
    $region24: #{doge_cdmoe_forward.2} parent=1 // pred_region
      _
    $region25: #{doge_cdmoe_forward.2} parent=1 // pred_fallthru
      _
    // Predicated region
    $region26: #{doge_cdmoe_forward.2} parent=1 // pred_check
      _
    $region27: #{doge_cdmoe_forward.2} parent=1 // pred_check_branch
      %442 = sbr.rel (0) target = $region29
    $region28: #{doge_cdmoe_forward.2} parent=1 // pred_region
      _
    $region29: #{doge_cdmoe_forward.2} parent=1 // pred_fallthru
      _
    // Predicated region
    $region30: #{doge_cdmoe_forward.2} parent=1 // pred_check
      _
    $region31: #{doge_cdmoe_forward.2} parent=1 // pred_check_branch
      %444 = sbr.rel (0) target = $region33
    $region32: #{doge_cdmoe_forward.2} parent=1 // pred_region
      _
    $region33: #{doge_cdmoe_forward.2} parent=1 // pred_fallthru
      _
    // Predicated region
    $region34: #{doge_cdmoe_forward.2} parent=1 // pred_check
      _
    $region35: #{doge_cdmoe_forward.2} parent=1 // pred_check_branch
      %446 = sbr.rel (0) target = $region37
    $region36: #{doge_cdmoe_forward.2} parent=1 // pred_region
      _
    $region37: #{doge_cdmoe_forward.2} parent=1 // pred_fallthru
      _
    %447 = vsyncpa [#allocation3], 1
    %448 = vsyncpa [#allocation5], 1

// kernel: doge_cdmoe_forward.3
$region0: #{doge_cdmoe_forward.3}
  #allocation0 [shape = 'u32[]', space=smem, size = 0x4, offset = 0x4, fixed_abs, tag = 'smem constant byte address 0x4 - core index']
  #allocation1 [shape = 'u32[144,128]{1,0:T(1,128)}', space=vmem, size = 0x12000, scoped, tag = 'internal scratch']
  %s0 = inlined_call_operand.vmem [shape: bf16[16,128], index: 0, kind: input, shape index: {}]
  %s1 = inlined_call_operand.vmem [shape: bf16[128,128], index: 1, kind: input, shape index: {}]
  %s2 = inlined_call_operand.vmem [shape: bf16[128,128], index: 2, kind: input, shape index: {}]
  %s3 = inlined_call_operand.vmem [shape: s32[16,128], index: 3, kind: input, shape index: {}]
  %s4 = inlined_call_operand.vmem [shape: f32[16,128], index: 4, kind: input, shape index: {}]
  %s5 = inlined_call_operand.vmem [shape: bf16[16,128], index: 5, kind: input, shape index: {}]
  %s6 = inlined_call_operand.vmem [shape: f32[16,128], index: 6, kind: output, shape index: {}]
  %s7 = sld [smem:[#allocation0]]
  $region34: #{doge_cdmoe_forward.3} parent=0
    _
  %s9 = ssub.s32 1, %s7
  %s10 = scalar_select 0, %s9, %s7
  // Predicated region
  $region2: #{doge_cdmoe_forward.3} parent=0 // pred_check
    _
  $region3: #{doge_cdmoe_forward.3} parent=0 // pred_check_branch
    %12 = sbr.rel (0) target = $region5
  $region4: #{doge_cdmoe_forward.3} parent=0 // pred_region
    _
  $region5: #{doge_cdmoe_forward.3} parent=0 // pred_fallthru
    _
  // Predicated region
  $region6: #{doge_cdmoe_forward.3} parent=0 // pred_check
    _
  $region7: #{doge_cdmoe_forward.3} parent=0 // pred_check_branch
    %14 = sbr.rel (0) target = $region9
  $region8: #{doge_cdmoe_forward.3} parent=0 // pred_region
    _
  $region9: #{doge_cdmoe_forward.3} parent=0 // pred_fallthru
    _
  // Predicated region
  $region10: #{doge_cdmoe_forward.3} parent=0 // pred_check
    _
  $region11: #{doge_cdmoe_forward.3} parent=0 // pred_check_branch
    %16 = sbr.rel (0) target = $region13
  $region12: #{doge_cdmoe_forward.3} parent=0 // pred_region
    _
  $region13: #{doge_cdmoe_forward.3} parent=0 // pred_fallthru
    _
  // Predicated region
  $region14: #{doge_cdmoe_forward.3} parent=0 // pred_check
    _
  $region15: #{doge_cdmoe_forward.3} parent=0 // pred_check_branch
    %18 = sbr.rel (0) target = $region17
  $region16: #{doge_cdmoe_forward.3} parent=0 // pred_region
    _
  $region17: #{doge_cdmoe_forward.3} parent=0 // pred_fallthru
    _
  // Predicated region
  $region18: #{doge_cdmoe_forward.3} parent=0 // pred_check
    _
  $region19: #{doge_cdmoe_forward.3} parent=0 // pred_check_branch
    %20 = sbr.rel (0) target = $region21
  $region20: #{doge_cdmoe_forward.3} parent=0 // pred_region
    _
  $region21: #{doge_cdmoe_forward.3} parent=0 // pred_fallthru
    _
  // Predicated region
  $region22: #{doge_cdmoe_forward.3} parent=0 // pred_check
    _
  $region23: #{doge_cdmoe_forward.3} parent=0 // pred_check_branch
    %22 = sbr.rel (0) target = $region25
  $region24: #{doge_cdmoe_forward.3} parent=0 // pred_region
    _
  $region25: #{doge_cdmoe_forward.3} parent=0 // pred_fallthru
    _
  %v24 = vld [vmem:[%s0] sm:$0xf]
  %v25 = vld [vmem:[%s0 + $0x4] sm:$0xf]
  %v26 = vld [vmem:[%s1] sm:$0xf]
  %v27 = vld [vmem:[%s1 + $0x4] sm:$0xf]
  %v28 = vld [vmem:[%s1 + $0x8] sm:$0xf]
  %v29 = vld [vmem:[%s1 + $0xc] sm:$0xf]
  %v30 = vld [vmem:[%s1 + $0x10] sm:$0xf]
  %v31 = vld [vmem:[%s1 + $0x14] sm:$0xf]
  %v32 = vld [vmem:[%s1 + $0x18] sm:$0xf]
  %v33 = vld [vmem:[%s1 + $0x1c] sm:$0xf]
  %v34 = vld [vmem:[%s1 + $0x20] sm:$0xf]
  %v35 = vld [vmem:[%s1 + $0x24] sm:$0xf]
  %v36 = vld [vmem:[%s1 + $0x28] sm:$0xf]
  %v37 = vld [vmem:[%s1 + $0x2c] sm:$0xf]
  %v38 = vld [vmem:[%s1 + $0x30] sm:$0xf]
  %v39 = vld [vmem:[%s1 + $0x34] sm:$0xf]
  %v40 = vld [vmem:[%s1 + $0x38] sm:$0xf]
  %v41 = vld [vmem:[%s1 + $0x3c] sm:$0xf]
  %v44 = vunpack.c.l.b16 %v24
  %v45 = vunpack.c.l.b16 %v25
  %v46 = vpack.c.b16 %v45, %v44
  %v64 = vunpack.c.l.b16 %v26
  %v65 = vunpack.c.l.b16 %v27
  %v66 = vunpack.c.l.b16 %v28
  %v67 = vunpack.c.l.b16 %v29
  %v68 = vunpack.c.l.b16 %v30
  %v69 = vunpack.c.l.b16 %v31
  %v70 = vunpack.c.l.b16 %v32
  %v71 = vunpack.c.l.b16 %v33
  %v72 = vunpack.c.l.b16 %v34
  %v73 = vunpack.c.l.b16 %v35
  %v74 = vunpack.c.l.b16 %v36
  %v75 = vunpack.c.l.b16 %v37
  %v76 = vunpack.c.l.b16 %v38
  %v77 = vunpack.c.l.b16 %v39
  %v78 = vunpack.c.l.b16 %v40
  %v79 = vunpack.c.l.b16 %v41
  %v80 = vpack.c.b16 %v65, %v64
  %v81 = vpack.c.b16 %v67, %v66
  %v82 = vpack.c.b16 %v69, %v68
  %v83 = vpack.c.b16 %v71, %v70
  %v84 = vpack.c.b16 %v73, %v72
  %v85 = vpack.c.b16 %v75, %v74
  %v86 = vpack.c.b16 %v77, %v76
  %v87 = vpack.c.b16 %v79, %v78
  %96 = vmatprep.subr.bf16.mxu0 0
  %97 = vmatpush1.bf16.xpose.msra.mxu0 %v80
  %98 = vmatprep.subr.bf16.mxu0 0
  %99 = vmatpush1.bf16.xpose.msra.mxu0 %v81
  %100 = vmatprep.subr.bf16.mxu0 0
  %101 = vmatpush1.bf16.xpose.msra.mxu0 %v82
  %102 = vmatprep.subr.bf16.mxu0 0
  %103 = vmatpush1.bf16.xpose.msra.mxu0 %v83
  %104 = vmatprep.subr.bf16.mxu0 0
  %105 = vmatpush1.bf16.xpose.msra.mxu0 %v84
  %106 = vmatprep.subr.bf16.mxu0 0
  %107 = vmatpush1.bf16.xpose.msra.mxu0 %v85
  %108 = vmatprep.subr.bf16.mxu0 0
  %109 = vmatpush1.bf16.xpose.msra.mxu0 %v86
  %110 = vmatprep.subr.bf16.mxu0 0
  %111 = vmatpush1.bf16.xpose.msra.mxu0 %v87
  %112 = vmatprep.subr.bf16.mxu0 0
  %113 = vmatpush1.bf16.xpose.msra.mxu0 0
  %114 = vmatprep.subr.bf16.mxu0 0
  %115 = vmatpush1.bf16.xpose.msra.mxu0 0
  %116 = vmatprep.subr.bf16.mxu0 0
  %117 = vmatpush1.bf16.xpose.msra.mxu0 0
  %118 = vmatprep.subr.bf16.mxu0 0
  %119 = vmatpush1.bf16.xpose.msra.mxu0 0
  %120 = vmatprep.subr.bf16.mxu0 0
  %121 = vmatpush1.bf16.xpose.msra.mxu0 0
  %122 = vmatprep.subr.bf16.mxu0 0
  %123 = vmatpush1.bf16.xpose.msra.mxu0 0
  %124 = vmatprep.subr.bf16.mxu0 0
  %125 = vmatpush1.bf16.xpose.msra.mxu0 0
  %126 = vmatprep.subr.bf16.mxu0 0
  %127 = vmatpush1.bf16.xpose.msra.mxu0 0
  %128 = vmatprep.mubr.bf16.mxu0 0
  %129 = vmatmul.mubr.bf16.gmra.mrb[0].mxu0 %v46
  %v130 = vpop.f32.mrb[0].mxu0
  %v131 = vadd.f32 0.0, %v130
  %v132 = vpop.f32.mrb[0].mxu0
  %v133 = vpop.f32.mrb[0].mxu0
  %v134 = vadd.f32 0.0, %v133
  %v135 = vpop.f32.mrb[0].mxu0
  %136 = vdwg.mxu0
  %v137 = vxor.u32 %v131, 2147483648
  %v138 = vxor.u32 %v134, 2147483648
  %v139 = vmul.f32 %v137, 1.442695
  %v140 = vpow.pop %v139
  %v141 = vmul.f32 %v138, 1.442695
  %v142 = vpow.pop %v141
  %v143 = vadd.f32 %v140, 1.0
  %v144 = vadd.f32 %v142, 1.0
  %v145 = vrcp.pop %v143
  %v146 = vmul.f32 1.0, %v145
  %v147 = vrcp.pop %v144
  %v148 = vmul.f32 1.0, %v147
  %v149 = vmul.f32 %v131, %v146
  %v150 = vmul.f32 %v134, %v148
  %v151 = vld [vmem:[%s3] sm:$0xff]
  %v152 = vld [vmem:[%s3 + $0x8] sm:$0xff]
  %v153 = vld [vmem:[%s4] sm:$0xff]
  %v154 = vld [vmem:[%s4 + $0x8] sm:$0xff]
  %v155 = vlaneseq
  %v156 = vand.u32 %v155, 127
  %157 = vset.pattern.permute.xlu0 0
  %158 = vperm.xlu0 %157, %v151
  %v159 = vpop.permute.xlu0 %158
  %160 = vset.pattern.permute.xlu0 0
  %161 = vperm.xlu0 %160, %v152
  %v162 = vpop.permute.xlu0 %161
  %vm163 = vcmp.eq.s32.totalorder %v156, %v159
  %vm164 = vcmp.eq.s32.totalorder %v156, %v162
  %166 = vset.pattern.permute.xlu0 0
  %167 = vperm.xlu0 %166, %v153
  %v168 = vpop.permute.xlu0 %167
  %171 = vset.pattern.permute.xlu0 0
  %172 = vperm.xlu0 %171, %v154
  %v173 = vpop.permute.xlu0 %172
  %v175 = vsel %vm163, %v168, 0.0
  %v176 = vsel %vm164, %v173, 0.0
  %v177 = vadd.f32 %v175, 0.0
  %v178 = vadd.f32 %v176, 0.0
  %179 = vset.pattern.permute.xlu0 1
  %180 = vperm.xlu0 %179, %v151
  %v181 = vpop.permute.xlu0 %180
  %182 = vset.pattern.permute.xlu0 1
  %183 = vperm.xlu0 %182, %v152
  %v184 = vpop.permute.xlu0 %183
  %vm185 = vcmp.eq.s32.totalorder %v156, %v181
  %vm186 = vcmp.eq.s32.totalorder %v156, %v184
  %187 = vset.pattern.permute.xlu0 1
  %188 = vperm.xlu0 %187, %v153
  %v189 = vpop.permute.xlu0 %188
  %191 = vset.pattern.permute.xlu0 1
  %192 = vperm.xlu0 %191, %v154
  %v193 = vpop.permute.xlu0 %192
  %v195 = vsel %vm185, %v189, 0.0
  %v196 = vsel %vm186, %v193, 0.0
  %v197 = vadd.f32 %v177, %v195
  %v198 = vadd.f32 %v178, %v196
  %199 = vset.pattern.permute.xlu0 2
  %200 = vperm.xlu0 %199, %v151
  %v201 = vpop.permute.xlu0 %200
  %202 = vset.pattern.permute.xlu0 2
  %203 = vperm.xlu0 %202, %v152
  %v204 = vpop.permute.xlu0 %203
  %vm205 = vcmp.eq.s32.totalorder %v156, %v201
  %vm206 = vcmp.eq.s32.totalorder %v156, %v204
  %207 = vset.pattern.permute.xlu0 2
  %208 = vperm.xlu0 %207, %v153
  %v209 = vpop.permute.xlu0 %208
  %211 = vset.pattern.permute.xlu0 2
  %212 = vperm.xlu0 %211, %v154
  %v213 = vpop.permute.xlu0 %212
  %v215 = vsel %vm205, %v209, 0.0
  %v216 = vsel %vm206, %v213, 0.0
  %v217 = vadd.f32 %v197, %v215
  %v218 = vadd.f32 %v198, %v216
  %219 = vset.pattern.permute.xlu0 3
  %220 = vperm.xlu0 %219, %v151
  %v221 = vpop.permute.xlu0 %220
  %222 = vset.pattern.permute.xlu0 3
  %223 = vperm.xlu0 %222, %v152
  %v224 = vpop.permute.xlu0 %223
  %vm225 = vcmp.eq.s32.totalorder %v156, %v221
  %vm226 = vcmp.eq.s32.totalorder %v156, %v224
  %227 = vset.pattern.permute.xlu0 3
  %228 = vperm.xlu0 %227, %v153
  %v229 = vpop.permute.xlu0 %228
  %231 = vset.pattern.permute.xlu0 3
  %232 = vperm.xlu0 %231, %v154
  %v233 = vpop.permute.xlu0 %232
  %v235 = vsel %vm225, %v229, 0.0
  %v236 = vsel %vm226, %v233, 0.0
  %v237 = vadd.f32 %v217, %v235
  %v238 = vadd.f32 %v218, %v236
  %v239 = vmul.f32 %v149, %v237
  %v240 = vmul.f32 %v150, %v238
  %v241 = vld [vmem:[%s2] sm:$0xf]
  %v242 = vld [vmem:[%s2 + $0x4] sm:$0xf]
  %v243 = vld [vmem:[%s2 + $0x8] sm:$0xf]
  %v244 = vld [vmem:[%s2 + $0xc] sm:$0xf]
  %v245 = vld [vmem:[%s2 + $0x10] sm:$0xf]
  %v246 = vld [vmem:[%s2 + $0x14] sm:$0xf]
  %v247 = vld [vmem:[%s2 + $0x18] sm:$0xf]
  %v248 = vld [vmem:[%s2 + $0x1c] sm:$0xf]
  %v249 = vld [vmem:[%s2 + $0x20] sm:$0xf]
  %v250 = vld [vmem:[%s2 + $0x24] sm:$0xf]
  %v251 = vld [vmem:[%s2 + $0x28] sm:$0xf]
  %v252 = vld [vmem:[%s2 + $0x2c] sm:$0xf]
  %v253 = vld [vmem:[%s2 + $0x30] sm:$0xf]
  %v254 = vld [vmem:[%s2 + $0x34] sm:$0xf]
  %v255 = vld [vmem:[%s2 + $0x38] sm:$0xf]
  %v256 = vld [vmem:[%s2 + $0x3c] sm:$0xf]
  %v257 = vunpack.c.l.bf16 %v241
  %v258 = vunpack.c.l.bf16 %v242
  %v259 = vunpack.c.l.bf16 %v243
  %v260 = vunpack.c.l.bf16 %v244
  %v261 = vunpack.c.l.bf16 %v245
  %v262 = vunpack.c.l.bf16 %v246
  %v263 = vunpack.c.l.bf16 %v247
  %v264 = vunpack.c.l.bf16 %v248
  %v265 = vunpack.c.l.bf16 %v249
  %v266 = vunpack.c.l.bf16 %v250
  %v267 = vunpack.c.l.bf16 %v251
  %v268 = vunpack.c.l.bf16 %v252
  %v269 = vunpack.c.l.bf16 %v253
  %v270 = vunpack.c.l.bf16 %v254
  %v271 = vunpack.c.l.bf16 %v255
  %v272 = vunpack.c.l.bf16 %v256
  %273 = vmatprep.subr.mxu0 0.0
  %274 = vmatpush1.msra.mxu0 %v257
  %275 = vmatprep.subr.mxu0 0.0
  %276 = vmatpush1.msra.mxu0 %v258
  %277 = vmatprep.subr.mxu0 0.0
  %278 = vmatpush1.msra.mxu0 %v259
  %279 = vmatprep.subr.mxu0 0.0
  %280 = vmatpush1.msra.mxu0 %v260
  %281 = vmatprep.subr.mxu0 0.0
  %282 = vmatpush1.msra.mxu0 %v261
  %283 = vmatprep.subr.mxu0 0.0
  %284 = vmatpush1.msra.mxu0 %v262
  %285 = vmatprep.subr.mxu0 0.0
  %286 = vmatpush1.msra.mxu0 %v263
  %287 = vmatprep.subr.mxu0 0.0
  %288 = vmatpush1.msra.mxu0 %v264
  %289 = vmatprep.subr.mxu0 0.0
  %290 = vmatpush1.msra.mxu0 %v265
  %291 = vmatprep.subr.mxu0 0.0
  %292 = vmatpush1.msra.mxu0 %v266
  %293 = vmatprep.subr.mxu0 0.0
  %294 = vmatpush1.msra.mxu0 %v267
  %295 = vmatprep.subr.mxu0 0.0
  %296 = vmatpush1.msra.mxu0 %v268
  %297 = vmatprep.subr.mxu0 0.0
  %298 = vmatpush1.msra.mxu0 %v269
  %299 = vmatprep.subr.mxu0 0.0
  %300 = vmatpush1.msra.mxu0 %v270
  %301 = vmatprep.subr.mxu0 0.0
  %302 = vmatpush1.msra.mxu0 %v271
  %303 = vmatprep.subr.mxu0 0.0
  %304 = vmatpush1.msra.mxu0 %v272
  %305 = vmatprep.subr.mxu0 0.0
  %306 = vmatpush1.msra.mxu0 0.0
  %307 = vmatprep.subr.mxu0 0.0
  %308 = vmatpush1.msra.mxu0 0.0
  %309 = vmatprep.subr.mxu0 0.0
  %310 = vmatpush1.msra.mxu0 0.0
  %311 = vmatprep.subr.mxu0 0.0
  %312 = vmatpush1.msra.mxu0 0.0
  %313 = vmatprep.subr.mxu0 0.0
  %314 = vmatpush1.msra.mxu0 0.0
  %315 = vmatprep.subr.mxu0 0.0
  %316 = vmatpush1.msra.mxu0 0.0
  %317 = vmatprep.subr.mxu0 0.0
  %318 = vmatpush1.msra.mxu0 0.0
  %319 = vmatprep.subr.mxu0 0.0
  %320 = vmatpush1.msra.mxu0 0.0
  %321 = vmatprep.subr.mxu0 0.0
  %322 = vmatpush1.msra.mxu0 0.0
  %323 = vmatprep.subr.mxu0 0.0
  %324 = vmatpush1.msra.mxu0 0.0
  %325 = vmatprep.subr.mxu0 0.0
  %326 = vmatpush1.msra.mxu0 0.0
  %327 = vmatprep.subr.mxu0 0.0
  %328 = vmatpush1.msra.mxu0 0.0
  %329 = vmatprep.subr.mxu0 0.0
  %330 = vmatpush1.msra.mxu0 0.0
  %331 = vmatprep.subr.mxu0 0.0
  %332 = vmatpush1.msra.mxu0 0.0
  %333 = vmatprep.subr.mxu0 0.0
  %334 = vmatpush1.msra.mxu0 0.0
  %335 = vmatprep.subr.mxu0 0.0
  %336 = vmatpush1.msra.mxu0 0.0
  %337 = vmatprep.mubr.f32.mxu0 0.0
  %338 = vmatmul.mubr.f32.gmra.mrb[0].mxu0 %v239
  %v339 = vpop.f32.mrb[0].mxu0
  %v340 = vadd.f32 0.0, %v339
  %v341 = vpop.f32.mrb[0].mxu0
  %342 = vmatprep.mubr.f32.mxu0 0.0
  %343 = vmatmul.mubr.f32.gmra.mrb[0].mxu0 %v240
  %v344 = vpop.f32.mrb[0].mxu0
  %v345 = vadd.f32 0.0, %v344
  %v346 = vpop.f32.mrb[0].mxu0
  %347 = vdwg.mxu0
  %v348 = vld [vmem:[%s5] sm:$0xf]
  %v349 = vld [vmem:[%s5 + $0x4] sm:$0xf]
  %v350 = vunpack.c.l.bf16 %v348
  %v351 = vunpack.c.l.bf16 %v349
  %v352 = vadd.f32 %v350, %v340
  %v353 = vadd.f32 %v351, %v345
  %354 = vst [vmem:[%s6] sm:$0xff] %v352
  %355 = vst [vmem:[%s6 + $0x8] sm:$0xff] %v353
  // Predicated region
  $region26: #{doge_cdmoe_forward.3} parent=0 // pred_check
    _
  $region27: #{doge_cdmoe_forward.3} parent=0 // pred_check_branch
    %357 = sbr.rel (0) target = $region29
  $region28: #{doge_cdmoe_forward.3} parent=0 // pred_region
    _
  $region29: #{doge_cdmoe_forward.3} parent=0 // pred_fallthru
    _
  // Predicated region
  $region30: #{doge_cdmoe_forward.3} parent=0 // pred_check
    _
  $region31: #{doge_cdmoe_forward.3} parent=0 // pred_check_branch
    %359 = sbr.rel (0) target = $region33
  $region32: #{doge_cdmoe_forward.3} parent=0 // pred_region
    _
  $region33: #{doge_cdmoe_forward.3} parent=0 // pred_fallthru
    _

</llo_original>
